<compile_context>
chip_gen: v7x
topology: tpu7x:2x2x1
jax: 0.10.0
libtpu: 0.0.40
codegen_flags: <defaults>
</compile_context>

<pallas_src>
import jax
import jax.numpy as jnp
from jax.experimental import pallas as pl
from jax.experimental.pallas import tpu as pltpu

_CHUNK = 8  # timesteps fused per grid step (== f32 sublane tile height)


def _gru_encoder_kernel(gi_ref,      # VMEM (C, 3H) f32 precomputed x-side gates for this chunk
                        h0_ref,      # VMEM (1, H)  f32 initial hidden state
                        whh_t_ref,   # VMEM (H, 3H) f32 W_hh^T, gates [r|z|n] (resident)
                        bhn_ref,     # VMEM (1, H)  f32 b_hn (only bias still needed in-kernel)
                        out_ref,     # VMEM (C, H)  f32 hidden state after each step of the chunk
                        h_scr):      # VMEM (1, H)  f32 hidden state carried across grid steps
    H = h0_ref.shape[-1]
    C = gi_ref.shape[0]

    # Load the initial hidden state into the carried scratch on the first chunk.
    @pl.when(pl.program_id(0) == 0)
    def _():
        h_scr[...] = h0_ref[...]

    whh_t = whh_t_ref[...]            # (H, 3H) resident weights, read once per chunk
    b_hn = bhn_ref[...]               # (1, H)

    def step(c, h):
        # Precomputed input-side gates for this timestep (biases already folded).
        gi = gi_ref[pl.ds(c, 1), :]                                    # (1, 3H)
        # Recurrent matmul: (1,H) x (H,3H) on the MXU, f32 accumulate.
        gh = jnp.dot(h, whh_t, preferred_element_type=jnp.float32)     # (1, 3H)

        # H is a multiple of 128 -> gate slices are lane-tile aligned.
        r = jax.nn.sigmoid(gi[:, 0:H] + gh[:, 0:H])
        z = jax.nn.sigmoid(gi[:, H:2 * H] + gh[:, H:2 * H])
        n = jnp.tanh(gi[:, 2 * H:3 * H] + r * (gh[:, 2 * H:3 * H] + b_hn))
        h_new = n + z * (h - n)                                        # == (1-z)*n + z*h

        out_ref[pl.ds(c, 1), :] = h_new       # row c of the (C,H) block (dense writeback per chunk)
        return h_new

    # Unrolled inner loop over the chunk (LLO visibility); carry hidden state.
    h_scr[...] = jax.lax.fori_loop(0, C, step, h_scr[...], unroll=True)


def prepare_params(emb, w_ih, w_hh, b_ih, b_hh):
    """One-time parameter prep (transpose + bias folding), kept out of the hot path.

    emb: (n_inp, H); w_ih/w_hh: (3H, H) PyTorch layout; b_ih/b_hh: (3H,).
    """
    H = emb.shape[1]
    b_ih = jnp.asarray(b_ih, jnp.float32)
    b_hh = jnp.asarray(b_hh, jnp.float32)
    # b_hr and b_hz are added pre-sigmoid anyway -> fold them into the input-side
    # bias so the precomputed gi table carries them.  Only b_hn must stay separate
    # (it is multiplied by r inside the n-gate).
    gi_bias = (b_ih + jnp.concatenate([b_hh[: 2 * H],
                                       jnp.zeros((H,), jnp.float32)])).reshape(1, 3 * H)
    return dict(
        emb=jnp.asarray(emb, jnp.float32),                       # (n_inp, H)
        wih_t=jnp.transpose(jnp.asarray(w_ih, jnp.float32)),     # (H, 3H)
        whh_t=jnp.transpose(jnp.asarray(w_hh, jnp.float32)),     # (H, 3H)
        gi_bias=gi_bias,                                          # (1, 3H)  b_ih + [b_hr|b_hz|0]
        b_hn=b_hh[2 * H:].reshape(1, H),                          # (1, H)
    )


@jax.jit
def encoder_rnn_forward(tokens, hid, params):
    """Run the encoder GRU over a token sequence.

    tokens: (T,) int32 token ids; hid: (1, 1, H) initial hidden state.
    Returns (out, hid'):
      out  : (T, 1, H) -- hidden state after each step (== nn.GRU per-step output)
      hid' : (1, 1, H) -- final hidden state.
    For T == 1 this is exactly EncoderRNN.forward(inp, hid).
    """
    emb, wih_t, whh_t = params["emb"], params["wih_t"], params["whh_t"]
    gi_bias, b_hn = params["gi_bias"], params["b_hn"]
    n_inp, H = emb.shape
    T = tokens.shape[0]

    # Clamp so a bad token id can never index outside the embedding table.
    # (PyTorch would raise here; we clamp instead.)
    tokens = jnp.clip(tokens.astype(jnp.int32), 0, n_inp - 1)
    h0 = hid.reshape(1, H).astype(jnp.float32)

    # Hoisted input-side gate GEMM: gather + one (T,H)x(H,3H) matmul, biases folded.
    x = jnp.take(emb, tokens, axis=0)                                        # (T, H)
    gi_all = jnp.dot(x, wih_t, preferred_element_type=jnp.float32,
                     precision=jax.lax.Precision.HIGHEST) + gi_bias          # (T, 3H)

    # Pad T up to a multiple of the chunk size; padded rows are discarded below.
    C = _CHUNK
    num_chunks = pl.cdiv(T, C)
    T_pad = num_chunks * C
    if T_pad != T:
        gi_all = jnp.pad(gi_all, ((0, T_pad - T), (0, 0)))

    grid_spec = pltpu.PrefetchScalarGridSpec(
        num_scalar_prefetch=0,
        grid=(num_chunks,),
        in_specs=[
            pl.BlockSpec((C, 3 * H), lambda i: (i, 0)),      # gi chunk (pipelined)
            pl.BlockSpec((1, H), lambda i: (0, 0)),          # h0 (read at chunk 0)
            pl.BlockSpec((H, 3 * H), lambda i: (0, 0)),      # W_hh^T (resident)
            pl.BlockSpec((1, H), lambda i: (0, 0)),          # b_hn
        ],
        out_specs=pl.BlockSpec((C, H), lambda i: (i, 0)),    # (C,H) rows per chunk
        scratch_shapes=[pltpu.VMEM((1, H), jnp.float32)],    # carried hidden state
    )

    out_seq = pl.pallas_call(
        _gru_encoder_kernel,
        out_shape=jax.ShapeDtypeStruct((T_pad, H), jnp.float32),
        grid_spec=grid_spec,
        compiler_params=pltpu.CompilerParams(
            dimension_semantics=("arbitrary",)),              # recurrence -> serial
    )(gi_all, h0, whh_t, b_hn)

    out = out_seq[:T].reshape(T, 1, H)
    hid_out = out_seq[T - 1].reshape(1, 1, H)                 # final hidden == row T-1
    return out, hid_out


def _reference_forward(tokens, hid, emb, w_ih, w_hh, b_ih, b_hh):
    """Pure-JAX reference with exact torch.nn.GRU math in f32 (independent of the kernel)."""
    H = emb.shape[1]
    wih_t = jnp.asarray(w_ih, jnp.float32).T
    whh_t = jnp.asarray(w_hh, jnp.float32).T
    b_ih = jnp.asarray(b_ih, jnp.float32)
    b_hh = jnp.asarray(b_hh, jnp.float32)
    emb = jnp.asarray(emb, jnp.float32)
    hp = jax.lax.Precision.HIGHEST

    def step(h, tok):
        x = emb[tok].reshape(1, H)
        gi = jnp.dot(x, wih_t, precision=hp) + b_ih
        gh = jnp.dot(h, whh_t, precision=hp) + b_hh
        r = jax.nn.sigmoid(gi[:, :H] + gh[:, :H])
        z = jax.nn.sigmoid(gi[:, H:2 * H] + gh[:, H:2 * H])
        n = jnp.tanh(gi[:, 2 * H:] + r * gh[:, 2 * H:])
        h_new = (1.0 - z) * n + z * h
        return h_new, h_new

    h0 = hid.reshape(1, H).astype(jnp.float32)
    toks = jnp.clip(tokens.astype(jnp.int32), 0, emb.shape[0] - 1)
    h_last, outs = jax.lax.scan(step, h0, toks)
    T = tokens.shape[0]
    return outs.reshape(T, 1, H), h_last.reshape(1, 1, H)


if __name__ == "__main__":
    n_inp = 64     # vocabulary size
    n_hid = 128    # hidden size (multiple of 128 -> lane-aligned gate slices)
    seq_len = 12   # exercises multi-chunk grid (2 chunks) + padding (4 padded rows)

    key = jax.random.PRNGKey(0)
    k_emb, k_wih, k_whh, k_bih, k_bhh, k_hid, k_tok = jax.random.split(key, 7)

    # PyTorch-like init: N(0,1) embedding, U(-1/sqrt(H), 1/sqrt(H)) GRU params.
    bound = 1.0 / (n_hid ** 0.5)
    emb = jax.random.normal(k_emb, (n_inp, n_hid), jnp.float32)
    w_ih = jax.random.uniform(k_wih, (3 * n_hid, n_hid), jnp.float32, -bound, bound)
    w_hh = jax.random.uniform(k_whh, (3 * n_hid, n_hid), jnp.float32, -bound, bound)
    b_ih = jax.random.uniform(k_bih, (3 * n_hid,), jnp.float32, -bound, bound)
    b_hh = jax.random.uniform(k_bhh, (3 * n_hid,), jnp.float32, -bound, bound)

    params = prepare_params(emb, w_ih, w_hh, b_ih, b_hh)

    tokens = jax.random.randint(k_tok, (seq_len,), 0, n_inp, jnp.int32)
    hid0 = jax.random.normal(k_hid, (1, 1, n_hid), jnp.float32)

    # Tolerance note: the only numeric difference vs the pure-XLA f32 reference is
    # MXU pass-rounding on the in-kernel recurrent matmul; a semantic error (wrong
    # gate order / formula) would be O(0.1) or larger.
    ATOL, RTOL = 5e-3, 1e-3

    # Full sequence (== seq_len successive EncoderRNN.forward calls).
    out, new_hid = encoder_rnn_forward(tokens, hid0, params)
    out = jax.block_until_ready(out)
    new_hid = jax.block_until_ready(new_hid)
    ref_out, ref_hid = _reference_forward(tokens, hid0, emb, w_ih, w_hh, b_ih, b_hh)
    assert out.shape == (seq_len, 1, n_hid) and new_hid.shape == (1, 1, n_hid)
    assert jnp.allclose(out, ref_out, atol=ATOL, rtol=RTOL), "sequence output mismatch vs reference"
    assert jnp.allclose(new_hid, ref_hid, atol=ATOL, rtol=RTOL), "final hidden mismatch vs reference"

    # Single step: exactly EncoderRNN.forward(inp, hid) -> (out, hid), both (1,1,H).
    out1, hid1 = encoder_rnn_forward(tokens[:1], hid0, params)
    out1 = jax.block_until_ready(out1)
    hid1 = jax.block_until_ready(hid1)
    ref_out1, ref_hid1 = _reference_forward(tokens[:1], hid0, emb, w_ih, w_hh, b_ih, b_hh)
    assert out1.shape == (1, 1, n_hid) and hid1.shape == (1, 1, n_hid)
    assert jnp.allclose(out1, ref_out1, atol=ATOL, rtol=RTOL), "single-step output mismatch"
    assert jnp.allclose(hid1, ref_hid1, atol=ATOL, rtol=RTOL), "single-step hidden mismatch"
    assert jnp.allclose(out1, hid1), "single-step out must equal new hidden"

    print("KERNEL_OK")
</pallas_src>

<mosaic_0001>
module attributes {stable_mosaic.version = 11 : i64} {
  func.func @_gru_encoder_kernel(%arg0: i32, %arg1: memref<8x384xf32, #tpu.memory_space<vmem>>, %arg2: memref<1x128xf32, #tpu.memory_space<vmem>>, %arg3: memref<128x384xf32, #tpu.memory_space<vmem>>, %arg4: memref<1x128xf32, #tpu.memory_space<vmem>>, %arg5: memref<8x128xf32, #tpu.memory_space<vmem>>, %arg6: memref<1x128xf32, #tpu.memory_space<vmem>>) attributes {dimension_semantics = [#tpu.dimension_semantics<arbitrary>], iteration_bounds = array<i64: 2>, scalar_prefetch = 0 : i64, scratch_operands = 1 : i64, tpu.core_type = #tpu.core_type<tc>, window_params = [{transform_indices = @transform_0, window_bounds = array<i64: 8, 384>}, {pipeline_mode = #tpu.pipeline_mode<synchronous>, transform_indices = @transform_1, window_bounds = array<i64: 1, 128>}, {pipeline_mode = #tpu.pipeline_mode<synchronous>, transform_indices = @transform_2, window_bounds = array<i64: 128, 384>}, {pipeline_mode = #tpu.pipeline_mode<synchronous>, transform_indices = @transform_3, window_bounds = array<i64: 1, 128>}, {transform_indices = @transform_4, window_bounds = array<i64: 8, 128>}]} {
    %c0_i32 = arith.constant 0 : i32
    %0 = arith.cmpi eq, %arg0, %c0_i32 : i32
    %1 = arith.extui %0 : i1 to i32
    %c0_i32_0 = arith.constant 0 : i32
    %2 = arith.cmpi ne, %1, %c0_i32_0 : i32
    scf.if %2 {
      %c0_48 = arith.constant 0 : index
      %c0_49 = arith.constant 0 : index
      %247 = vector.load %arg2[%c0_48, %c0_49] : memref<1x128xf32, #tpu.memory_space<vmem>>, vector<1x128xf32>
      %c0_50 = arith.constant 0 : index
      %c0_51 = arith.constant 0 : index
      %248 = vector.load %arg6[%c0_50, %c0_51] : memref<1x128xf32, #tpu.memory_space<vmem>>, vector<1x128xf32>
      tpu.vector_store %arg6[%c0_50, %c0_51], %247 {strides = array<i32>} : memref<1x128xf32, #tpu.memory_space<vmem>>, vector<1x128xf32>,
    } else {
    }
    %c0 = arith.constant 0 : index
    %c0_1 = arith.constant 0 : index
    %3 = vector.load %arg3[%c0, %c0_1] : memref<128x384xf32, #tpu.memory_space<vmem>>, vector<128x384xf32>
    %c0_2 = arith.constant 0 : index
    %c0_3 = arith.constant 0 : index
    %4 = vector.load %arg4[%c0_2, %c0_3] : memref<1x128xf32, #tpu.memory_space<vmem>>, vector<1x128xf32>
    %c0_4 = arith.constant 0 : index
    %c0_5 = arith.constant 0 : index
    %5 = vector.load %arg6[%c0_4, %c0_5] : memref<1x128xf32, #tpu.memory_space<vmem>>, vector<1x128xf32>
    %c0_i32_6 = arith.constant 0 : i32
    %6 = arith.index_cast %c0_i32_6 : i32 to index
    %c0_7 = arith.constant 0 : index
    %7 = vector.load %arg1[%6, %c0_7] : memref<8x384xf32, #tpu.memory_space<vmem>>, vector<1x384xf32>
    %cst = arith.constant dense<0.000000e+00> : vector<1x384xf32>
    %8 = tpu.matmul %5, %3, %cst {dimension_numbers = #tpu.dot_dimension_numbers<[1], [0], [0], [1], [0, 0, 1, 1], [], []>} : vector<1x128xf32>, vector<128x384xf32>, vector<1x384xf32> -> vector<1x384xf32>
    %9 = vector.extract_strided_slice %7 {offsets = [0, 0], sizes = [1, 128], strides = [1, 1]} : vector<1x384xf32> to vector<1x128xf32>
    %10 = vector.extract_strided_slice %8 {offsets = [0, 0], sizes = [1, 128], strides = [1, 1]} : vector<1x384xf32> to vector<1x128xf32>
    %11 = arith.addf %9, %10 : vector<1x128xf32>
    %12 = arith.negf %11 : vector<1x128xf32>
    %13 = math.exp %12 : vector<1x128xf32>
    %cst_8 = arith.constant 1.000000e+00 : f32
    %14 = vector.broadcast %cst_8 : f32 to vector<1x128xf32>
    %15 = arith.addf %14, %13 : vector<1x128xf32>
    %16 = arith.divf %14, %15 : vector<1x128xf32>
    %17 = vector.extract_strided_slice %7 {offsets = [0, 128], sizes = [1, 128], strides = [1, 1]} : vector<1x384xf32> to vector<1x128xf32>
    %18 = vector.extract_strided_slice %8 {offsets = [0, 128], sizes = [1, 128], strides = [1, 1]} : vector<1x384xf32> to vector<1x128xf32>
    %19 = arith.addf %17, %18 : vector<1x128xf32>
    %20 = arith.negf %19 : vector<1x128xf32>
    %21 = math.exp %20 : vector<1x128xf32>
    %cst_9 = arith.constant 1.000000e+00 : f32
    %22 = vector.broadcast %cst_9 : f32 to vector<1x128xf32>
    %23 = arith.addf %22, %21 : vector<1x128xf32>
    %24 = arith.divf %22, %23 : vector<1x128xf32>
    %25 = vector.extract_strided_slice %7 {offsets = [0, 256], sizes = [1, 128], strides = [1, 1]} : vector<1x384xf32> to vector<1x128xf32>
    %26 = vector.extract_strided_slice %8 {offsets = [0, 256], sizes = [1, 128], strides = [1, 1]} : vector<1x384xf32> to vector<1x128xf32>
    %27 = arith.addf %26, %4 : vector<1x128xf32>
    %28 = arith.mulf %16, %27 : vector<1x128xf32>
    %29 = arith.addf %25, %28 : vector<1x128xf32>
    %30 = math.tanh %29 : vector<1x128xf32>
    %31 = arith.subf %5, %30 : vector<1x128xf32>
    %32 = arith.mulf %24, %31 : vector<1x128xf32>
    %33 = arith.addf %30, %32 : vector<1x128xf32>
    %34 = arith.index_cast %c0_i32_6 : i32 to index
    %c0_10 = arith.constant 0 : index
    %35 = vector.load %arg5[%34, %c0_10] : memref<8x128xf32, #tpu.memory_space<vmem>>, vector<1x128xf32>
    tpu.vector_store %arg5[%34, %c0_10], %33 {strides = array<i32>} : memref<8x128xf32, #tpu.memory_space<vmem>>, vector<1x128xf32>,
    %c1_i32 = arith.constant 1 : i32
    %36 = arith.index_cast %c1_i32 : i32 to index
    %c0_11 = arith.constant 0 : index
    %37 = vector.load %arg1[%36, %c0_11] : memref<8x384xf32, #tpu.memory_space<vmem>>, vector<1x384xf32>
    %cst_12 = arith.constant dense<0.000000e+00> : vector<1x384xf32>
    %38 = tpu.matmul %33, %3, %cst_12 {dimension_numbers = #tpu.dot_dimension_numbers<[1], [0], [0], [1], [0, 0, 1, 1], [], []>} : vector<1x128xf32>, vector<128x384xf32>, vector<1x384xf32> -> vector<1x384xf32>
    %39 = vector.extract_strided_slice %37 {offsets = [0, 0], sizes = [1, 128], strides = [1, 1]} : vector<1x384xf32> to vector<1x128xf32>
    %40 = vector.extract_strided_slice %38 {offsets = [0, 0], sizes = [1, 128], strides = [1, 1]} : vector<1x384xf32> to vector<1x128xf32>
    %41 = arith.addf %39, %40 : vector<1x128xf32>
    %42 = arith.negf %41 : vector<1x128xf32>
    %43 = math.exp %42 : vector<1x128xf32>
    %cst_13 = arith.constant 1.000000e+00 : f32
    %44 = vector.broadcast %cst_13 : f32 to vector<1x128xf32>
    %45 = arith.addf %44, %43 : vector<1x128xf32>
    %46 = arith.divf %44, %45 : vector<1x128xf32>
    %47 = vector.extract_strided_slice %37 {offsets = [0, 128], sizes = [1, 128], strides = [1, 1]} : vector<1x384xf32> to vector<1x128xf32>
    %48 = vector.extract_strided_slice %38 {offsets = [0, 128], sizes = [1, 128], strides = [1, 1]} : vector<1x384xf32> to vector<1x128xf32>
    %49 = arith.addf %47, %48 : vector<1x128xf32>
    %50 = arith.negf %49 : vector<1x128xf32>
    %51 = math.exp %50 : vector<1x128xf32>
    %cst_14 = arith.constant 1.000000e+00 : f32
    %52 = vector.broadcast %cst_14 : f32 to vector<1x128xf32>
    %53 = arith.addf %52, %51 : vector<1x128xf32>
    %54 = arith.divf %52, %53 : vector<1x128xf32>
    %55 = vector.extract_strided_slice %37 {offsets = [0, 256], sizes = [1, 128], strides = [1, 1]} : vector<1x384xf32> to vector<1x128xf32>
    %56 = vector.extract_strided_slice %38 {offsets = [0, 256], sizes = [1, 128], strides = [1, 1]} : vector<1x384xf32> to vector<1x128xf32>
    %57 = arith.addf %56, %4 : vector<1x128xf32>
    %58 = arith.mulf %46, %57 : vector<1x128xf32>
    %59 = arith.addf %55, %58 : vector<1x128xf32>
    %60 = math.tanh %59 : vector<1x128xf32>
    %61 = arith.subf %33, %60 : vector<1x128xf32>
    %62 = arith.mulf %54, %61 : vector<1x128xf32>
    %63 = arith.addf %60, %62 : vector<1x128xf32>
    %64 = arith.index_cast %c1_i32 : i32 to index
    %c0_15 = arith.constant 0 : index
    %65 = vector.load %arg5[%64, %c0_15] : memref<8x128xf32, #tpu.memory_space<vmem>>, vector<1x128xf32>
    tpu.vector_store %arg5[%64, %c0_15], %63 {strides = array<i32>} : memref<8x128xf32, #tpu.memory_space<vmem>>, vector<1x128xf32>,
    %c2_i32 = arith.constant 2 : i32
    %66 = arith.index_cast %c2_i32 : i32 to index
    %c0_16 = arith.constant 0 : index
    %67 = vector.load %arg1[%66, %c0_16] : memref<8x384xf32, #tpu.memory_space<vmem>>, vector<1x384xf32>
    %cst_17 = arith.constant dense<0.000000e+00> : vector<1x384xf32>
    %68 = tpu.matmul %63, %3, %cst_17 {dimension_numbers = #tpu.dot_dimension_numbers<[1], [0], [0], [1], [0, 0, 1, 1], [], []>} : vector<1x128xf32>, vector<128x384xf32>, vector<1x384xf32> -> vector<1x384xf32>
    %69 = vector.extract_strided_slice %67 {offsets = [0, 0], sizes = [1, 128], strides = [1, 1]} : vector<1x384xf32> to vector<1x128xf32>
    %70 = vector.extract_strided_slice %68 {offsets = [0, 0], sizes = [1, 128], strides = [1, 1]} : vector<1x384xf32> to vector<1x128xf32>
    %71 = arith.addf %69, %70 : vector<1x128xf32>
    %72 = arith.negf %71 : vector<1x128xf32>
    %73 = math.exp %72 : vector<1x128xf32>
    %cst_18 = arith.constant 1.000000e+00 : f32
    %74 = vector.broadcast %cst_18 : f32 to vector<1x128xf32>
    %75 = arith.addf %74, %73 : vector<1x128xf32>
    %76 = arith.divf %74, %75 : vector<1x128xf32>
    %77 = vector.extract_strided_slice %67 {offsets = [0, 128], sizes = [1, 128], strides = [1, 1]} : vector<1x384xf32> to vector<1x128xf32>
    %78 = vector.extract_strided_slice %68 {offsets = [0, 128], sizes = [1, 128], strides = [1, 1]} : vector<1x384xf32> to vector<1x128xf32>
    %79 = arith.addf %77, %78 : vector<1x128xf32>
    %80 = arith.negf %79 : vector<1x128xf32>
    %81 = math.exp %80 : vector<1x128xf32>
    %cst_19 = arith.constant 1.000000e+00 : f32
    %82 = vector.broadcast %cst_19 : f32 to vector<1x128xf32>
    %83 = arith.addf %82, %81 : vector<1x128xf32>
    %84 = arith.divf %82, %83 : vector<1x128xf32>
    %85 = vector.extract_strided_slice %67 {offsets = [0, 256], sizes = [1, 128], strides = [1, 1]} : vector<1x384xf32> to vector<1x128xf32>
    %86 = vector.extract_strided_slice %68 {offsets = [0, 256], sizes = [1, 128], strides = [1, 1]} : vector<1x384xf32> to vector<1x128xf32>
    %87 = arith.addf %86, %4 : vector<1x128xf32>
    %88 = arith.mulf %76, %87 : vector<1x128xf32>
    %89 = arith.addf %85, %88 : vector<1x128xf32>
    %90 = math.tanh %89 : vector<1x128xf32>
    %91 = arith.subf %63, %90 : vector<1x128xf32>
    %92 = arith.mulf %84, %91 : vector<1x128xf32>
    %93 = arith.addf %90, %92 : vector<1x128xf32>
    %94 = arith.index_cast %c2_i32 : i32 to index
    %c0_20 = arith.constant 0 : index
    %95 = vector.load %arg5[%94, %c0_20] : memref<8x128xf32, #tpu.memory_space<vmem>>, vector<1x128xf32>
    tpu.vector_store %arg5[%94, %c0_20], %93 {strides = array<i32>} : memref<8x128xf32, #tpu.memory_space<vmem>>, vector<1x128xf32>,
    %c3_i32 = arith.constant 3 : i32
    %96 = arith.index_cast %c3_i32 : i32 to index
    %c0_21 = arith.constant 0 : index
    %97 = vector.load %arg1[%96, %c0_21] : memref<8x384xf32, #tpu.memory_space<vmem>>, vector<1x384xf32>
    %cst_22 = arith.constant dense<0.000000e+00> : vector<1x384xf32>
    %98 = tpu.matmul %93, %3, %cst_22 {dimension_numbers = #tpu.dot_dimension_numbers<[1], [0], [0], [1], [0, 0, 1, 1], [], []>} : vector<1x128xf32>, vector<128x384xf32>, vector<1x384xf32> -> vector<1x384xf32>
    %99 = vector.extract_strided_slice %97 {offsets = [0, 0], sizes = [1, 128], strides = [1, 1]} : vector<1x384xf32> to vector<1x128xf32>
    %100 = vector.extract_strided_slice %98 {offsets = [0, 0], sizes = [1, 128], strides = [1, 1]} : vector<1x384xf32> to vector<1x128xf32>
    %101 = arith.addf %99, %100 : vector<1x128xf32>
    %102 = arith.negf %101 : vector<1x128xf32>
    %103 = math.exp %102 : vector<1x128xf32>
    %cst_23 = arith.constant 1.000000e+00 : f32
    %104 = vector.broadcast %cst_23 : f32 to vector<1x128xf32>
    %105 = arith.addf %104, %103 : vector<1x128xf32>
    %106 = arith.divf %104, %105 : vector<1x128xf32>
    %107 = vector.extract_strided_slice %97 {offsets = [0, 128], sizes = [1, 128], strides = [1, 1]} : vector<1x384xf32> to vector<1x128xf32>
    %108 = vector.extract_strided_slice %98 {offsets = [0, 128], sizes = [1, 128], strides = [1, 1]} : vector<1x384xf32> to vector<1x128xf32>
    %109 = arith.addf %107, %108 : vector<1x128xf32>
    %110 = arith.negf %109 : vector<1x128xf32>
    %111 = math.exp %110 : vector<1x128xf32>
    %cst_24 = arith.constant 1.000000e+00 : f32
    %112 = vector.broadcast %cst_24 : f32 to vector<1x128xf32>
    %113 = arith.addf %112, %111 : vector<1x128xf32>
    %114 = arith.divf %112, %113 : vector<1x128xf32>
    %115 = vector.extract_strided_slice %97 {offsets = [0, 256], sizes = [1, 128], strides = [1, 1]} : vector<1x384xf32> to vector<1x128xf32>
    %116 = vector.extract_strided_slice %98 {offsets = [0, 256], sizes = [1, 128], strides = [1, 1]} : vector<1x384xf32> to vector<1x128xf32>
    %117 = arith.addf %116, %4 : vector<1x128xf32>
    %118 = arith.mulf %106, %117 : vector<1x128xf32>
    %119 = arith.addf %115, %118 : vector<1x128xf32>
    %120 = math.tanh %119 : vector<1x128xf32>
    %121 = arith.subf %93, %120 : vector<1x128xf32>
    %122 = arith.mulf %114, %121 : vector<1x128xf32>
    %123 = arith.addf %120, %122 : vector<1x128xf32>
    %124 = arith.index_cast %c3_i32 : i32 to index
    %c0_25 = arith.constant 0 : index
    %125 = vector.load %arg5[%124, %c0_25] : memref<8x128xf32, #tpu.memory_space<vmem>>, vector<1x128xf32>
    tpu.vector_store %arg5[%124, %c0_25], %123 {strides = array<i32>} : memref<8x128xf32, #tpu.memory_space<vmem>>, vector<1x128xf32>,
    %c4_i32 = arith.constant 4 : i32
    %126 = arith.index_cast %c4_i32 : i32 to index
    %c0_26 = arith.constant 0 : index
    %127 = vector.load %arg1[%126, %c0_26] : memref<8x384xf32, #tpu.memory_space<vmem>>, vector<1x384xf32>
    %cst_27 = arith.constant dense<0.000000e+00> : vector<1x384xf32>
    %128 = tpu.matmul %123, %3, %cst_27 {dimension_numbers = #tpu.dot_dimension_numbers<[1], [0], [0], [1], [0, 0, 1, 1], [], []>} : vector<1x128xf32>, vector<128x384xf32>, vector<1x384xf32> -> vector<1x384xf32>
    %129 = vector.extract_strided_slice %127 {offsets = [0, 0], sizes = [1, 128], strides = [1, 1]} : vector<1x384xf32> to vector<1x128xf32>
    %130 = vector.extract_strided_slice %128 {offsets = [0, 0], sizes = [1, 128], strides = [1, 1]} : vector<1x384xf32> to vector<1x128xf32>
    %131 = arith.addf %129, %130 : vector<1x128xf32>
    %132 = arith.negf %131 : vector<1x128xf32>
    %133 = math.exp %132 : vector<1x128xf32>
    %cst_28 = arith.constant 1.000000e+00 : f32
    %134 = vector.broadcast %cst_28 : f32 to vector<1x128xf32>
    %135 = arith.addf %134, %133 : vector<1x128xf32>
    %136 = arith.divf %134, %135 : vector<1x128xf32>
    %137 = vector.extract_strided_slice %127 {offsets = [0, 128], sizes = [1, 128], strides = [1, 1]} : vector<1x384xf32> to vector<1x128xf32>
    %138 = vector.extract_strided_slice %128 {offsets = [0, 128], sizes = [1, 128], strides = [1, 1]} : vector<1x384xf32> to vector<1x128xf32>
    %139 = arith.addf %137, %138 : vector<1x128xf32>
    %140 = arith.negf %139 : vector<1x128xf32>
    %141 = math.exp %140 : vector<1x128xf32>
    %cst_29 = arith.constant 1.000000e+00 : f32
    %142 = vector.broadcast %cst_29 : f32 to vector<1x128xf32>
    %143 = arith.addf %142, %141 : vector<1x128xf32>
    %144 = arith.divf %142, %143 : vector<1x128xf32>
    %145 = vector.extract_strided_slice %127 {offsets = [0, 256], sizes = [1, 128], strides = [1, 1]} : vector<1x384xf32> to vector<1x128xf32>
    %146 = vector.extract_strided_slice %128 {offsets = [0, 256], sizes = [1, 128], strides = [1, 1]} : vector<1x384xf32> to vector<1x128xf32>
    %147 = arith.addf %146, %4 : vector<1x128xf32>
    %148 = arith.mulf %136, %147 : vector<1x128xf32>
    %149 = arith.addf %145, %148 : vector<1x128xf32>
    %150 = math.tanh %149 : vector<1x128xf32>
    %151 = arith.subf %123, %150 : vector<1x128xf32>
    %152 = arith.mulf %144, %151 : vector<1x128xf32>
    %153 = arith.addf %150, %152 : vector<1x128xf32>
    %154 = arith.index_cast %c4_i32 : i32 to index
    %c0_30 = arith.constant 0 : index
    %155 = vector.load %arg5[%154, %c0_30] : memref<8x128xf32, #tpu.memory_space<vmem>>, vector<1x128xf32>
    tpu.vector_store %arg5[%154, %c0_30], %153 {strides = array<i32>} : memref<8x128xf32, #tpu.memory_space<vmem>>, vector<1x128xf32>,
    %c5_i32 = arith.constant 5 : i32
    %156 = arith.index_cast %c5_i32 : i32 to index
    %c0_31 = arith.constant 0 : index
    %157 = vector.load %arg1[%156, %c0_31] : memref<8x384xf32, #tpu.memory_space<vmem>>, vector<1x384xf32>
    %cst_32 = arith.constant dense<0.000000e+00> : vector<1x384xf32>
    %158 = tpu.matmul %153, %3, %cst_32 {dimension_numbers = #tpu.dot_dimension_numbers<[1], [0], [0], [1], [0, 0, 1, 1], [], []>} : vector<1x128xf32>, vector<128x384xf32>, vector<1x384xf32> -> vector<1x384xf32>
    %159 = vector.extract_strided_slice %157 {offsets = [0, 0], sizes = [1, 128], strides = [1, 1]} : vector<1x384xf32> to vector<1x128xf32>
    %160 = vector.extract_strided_slice %158 {offsets = [0, 0], sizes = [1, 128], strides = [1, 1]} : vector<1x384xf32> to vector<1x128xf32>
    %161 = arith.addf %159, %160 : vector<1x128xf32>
    %162 = arith.negf %161 : vector<1x128xf32>
    %163 = math.exp %162 : vector<1x128xf32>
    %cst_33 = arith.constant 1.000000e+00 : f32
    %164 = vector.broadcast %cst_33 : f32 to vector<1x128xf32>
    %165 = arith.addf %164, %163 : vector<1x128xf32>
    %166 = arith.divf %164, %165 : vector<1x128xf32>
    %167 = vector.extract_strided_slice %157 {offsets = [0, 128], sizes = [1, 128], strides = [1, 1]} : vector<1x384xf32> to vector<1x128xf32>
    %168 = vector.extract_strided_slice %158 {offsets = [0, 128], sizes = [1, 128], strides = [1, 1]} : vector<1x384xf32> to vector<1x128xf32>
    %169 = arith.addf %167, %168 : vector<1x128xf32>
    %170 = arith.negf %169 : vector<1x128xf32>
    %171 = math.exp %170 : vector<1x128xf32>
    %cst_34 = arith.constant 1.000000e+00 : f32
    %172 = vector.broadcast %cst_34 : f32 to vector<1x128xf32>
    %173 = arith.addf %172, %171 : vector<1x128xf32>
    %174 = arith.divf %172, %173 : vector<1x128xf32>
    %175 = vector.extract_strided_slice %157 {offsets = [0, 256], sizes = [1, 128], strides = [1, 1]} : vector<1x384xf32> to vector<1x128xf32>
    %176 = vector.extract_strided_slice %158 {offsets = [0, 256], sizes = [1, 128], strides = [1, 1]} : vector<1x384xf32> to vector<1x128xf32>
    %177 = arith.addf %176, %4 : vector<1x128xf32>
    %178 = arith.mulf %166, %177 : vector<1x128xf32>
    %179 = arith.addf %175, %178 : vector<1x128xf32>
    %180 = math.tanh %179 : vector<1x128xf32>
    %181 = arith.subf %153, %180 : vector<1x128xf32>
    %182 = arith.mulf %174, %181 : vector<1x128xf32>
    %183 = arith.addf %180, %182 : vector<1x128xf32>
    %184 = arith.index_cast %c5_i32 : i32 to index
    %c0_35 = arith.constant 0 : index
    %185 = vector.load %arg5[%184, %c0_35] : memref<8x128xf32, #tpu.memory_space<vmem>>, vector<1x128xf32>
    tpu.vector_store %arg5[%184, %c0_35], %183 {strides = array<i32>} : memref<8x128xf32, #tpu.memory_space<vmem>>, vector<1x128xf32>,
    %c6_i32 = arith.constant 6 : i32
    %186 = arith.index_cast %c6_i32 : i32 to index
    %c0_36 = arith.constant 0 : index
    %187 = vector.load %arg1[%186, %c0_36] : memref<8x384xf32, #tpu.memory_space<vmem>>, vector<1x384xf32>
    %cst_37 = arith.constant dense<0.000000e+00> : vector<1x384xf32>
    %188 = tpu.matmul %183, %3, %cst_37 {dimension_numbers = #tpu.dot_dimension_numbers<[1], [0], [0], [1], [0, 0, 1, 1], [], []>} : vector<1x128xf32>, vector<128x384xf32>, vector<1x384xf32> -> vector<1x384xf32>
    %189 = vector.extract_strided_slice %187 {offsets = [0, 0], sizes = [1, 128], strides = [1, 1]} : vector<1x384xf32> to vector<1x128xf32>
    %190 = vector.extract_strided_slice %188 {offsets = [0, 0], sizes = [1, 128], strides = [1, 1]} : vector<1x384xf32> to vector<1x128xf32>
    %191 = arith.addf %189, %190 : vector<1x128xf32>
    %192 = arith.negf %191 : vector<1x128xf32>
    %193 = math.exp %192 : vector<1x128xf32>
    %cst_38 = arith.constant 1.000000e+00 : f32
    %194 = vector.broadcast %cst_38 : f32 to vector<1x128xf32>
    %195 = arith.addf %194, %193 : vector<1x128xf32>
    %196 = arith.divf %194, %195 : vector<1x128xf32>
    %197 = vector.extract_strided_slice %187 {offsets = [0, 128], sizes = [1, 128], strides = [1, 1]} : vector<1x384xf32> to vector<1x128xf32>
    %198 = vector.extract_strided_slice %188 {offsets = [0, 128], sizes = [1, 128], strides = [1, 1]} : vector<1x384xf32> to vector<1x128xf32>
    %199 = arith.addf %197, %198 : vector<1x128xf32>
    %200 = arith.negf %199 : vector<1x128xf32>
    %201 = math.exp %200 : vector<1x128xf32>
    %cst_39 = arith.constant 1.000000e+00 : f32
    %202 = vector.broadcast %cst_39 : f32 to vector<1x128xf32>
    %203 = arith.addf %202, %201 : vector<1x128xf32>
    %204 = arith.divf %202, %203 : vector<1x128xf32>
    %205 = vector.extract_strided_slice %187 {offsets = [0, 256], sizes = [1, 128], strides = [1, 1]} : vector<1x384xf32> to vector<1x128xf32>
    %206 = vector.extract_strided_slice %188 {offsets = [0, 256], sizes = [1, 128], strides = [1, 1]} : vector<1x384xf32> to vector<1x128xf32>
    %207 = arith.addf %206, %4 : vector<1x128xf32>
    %208 = arith.mulf %196, %207 : vector<1x128xf32>
    %209 = arith.addf %205, %208 : vector<1x128xf32>
    %210 = math.tanh %209 : vector<1x128xf32>
    %211 = arith.subf %183, %210 : vector<1x128xf32>
    %212 = arith.mulf %204, %211 : vector<1x128xf32>
    %213 = arith.addf %210, %212 : vector<1x128xf32>
    %214 = arith.index_cast %c6_i32 : i32 to index
    %c0_40 = arith.constant 0 : index
    %215 = vector.load %arg5[%214, %c0_40] : memref<8x128xf32, #tpu.memory_space<vmem>>, vector<1x128xf32>
    tpu.vector_store %arg5[%214, %c0_40], %213 {strides = array<i32>} : memref<8x128xf32, #tpu.memory_space<vmem>>, vector<1x128xf32>,
    %c7_i32 = arith.constant 7 : i32
    %216 = arith.index_cast %c7_i32 : i32 to index
    %c0_41 = arith.constant 0 : index
    %217 = vector.load %arg1[%216, %c0_41] : memref<8x384xf32, #tpu.memory_space<vmem>>, vector<1x384xf32>
    %cst_42 = arith.constant dense<0.000000e+00> : vector<1x384xf32>
    %218 = tpu.matmul %213, %3, %cst_42 {dimension_numbers = #tpu.dot_dimension_numbers<[1], [0], [0], [1], [0, 0, 1, 1], [], []>} : vector<1x128xf32>, vector<128x384xf32>, vector<1x384xf32> -> vector<1x384xf32>
    %219 = vector.extract_strided_slice %217 {offsets = [0, 0], sizes = [1, 128], strides = [1, 1]} : vector<1x384xf32> to vector<1x128xf32>
    %220 = vector.extract_strided_slice %218 {offsets = [0, 0], sizes = [1, 128], strides = [1, 1]} : vector<1x384xf32> to vector<1x128xf32>
    %221 = arith.addf %219, %220 : vector<1x128xf32>
    %222 = arith.negf %221 : vector<1x128xf32>
    %223 = math.exp %222 : vector<1x128xf32>
    %cst_43 = arith.constant 1.000000e+00 : f32
    %224 = vector.broadcast %cst_43 : f32 to vector<1x128xf32>
    %225 = arith.addf %224, %223 : vector<1x128xf32>
    %226 = arith.divf %224, %225 : vector<1x128xf32>
    %227 = vector.extract_strided_slice %217 {offsets = [0, 128], sizes = [1, 128], strides = [1, 1]} : vector<1x384xf32> to vector<1x128xf32>
    %228 = vector.extract_strided_slice %218 {offsets = [0, 128], sizes = [1, 128], strides = [1, 1]} : vector<1x384xf32> to vector<1x128xf32>
    %229 = arith.addf %227, %228 : vector<1x128xf32>
    %230 = arith.negf %229 : vector<1x128xf32>
    %231 = math.exp %230 : vector<1x128xf32>
    %cst_44 = arith.constant 1.000000e+00 : f32
    %232 = vector.broadcast %cst_44 : f32 to vector<1x128xf32>
    %233 = arith.addf %232, %231 : vector<1x128xf32>
    %234 = arith.divf %232, %233 : vector<1x128xf32>
    %235 = vector.extract_strided_slice %217 {offsets = [0, 256], sizes = [1, 128], strides = [1, 1]} : vector<1x384xf32> to vector<1x128xf32>
    %236 = vector.extract_strided_slice %218 {offsets = [0, 256], sizes = [1, 128], strides = [1, 1]} : vector<1x384xf32> to vector<1x128xf32>
    %237 = arith.addf %236, %4 : vector<1x128xf32>
    %238 = arith.mulf %226, %237 : vector<1x128xf32>
    %239 = arith.addf %235, %238 : vector<1x128xf32>
    %240 = math.tanh %239 : vector<1x128xf32>
    %241 = arith.subf %213, %240 : vector<1x128xf32>
    %242 = arith.mulf %234, %241 : vector<1x128xf32>
    %243 = arith.addf %240, %242 : vector<1x128xf32>
    %244 = arith.index_cast %c7_i32 : i32 to index
    %c0_45 = arith.constant 0 : index
    %245 = vector.load %arg5[%244, %c0_45] : memref<8x128xf32, #tpu.memory_space<vmem>>, vector<1x128xf32>
    tpu.vector_store %arg5[%244, %c0_45], %243 {strides = array<i32>} : memref<8x128xf32, #tpu.memory_space<vmem>>, vector<1x128xf32>,
    %c8_i32 = arith.constant 8 : i32
    %c0_46 = arith.constant 0 : index
    %c0_47 = arith.constant 0 : index
    %246 = vector.load %arg6[%c0_46, %c0_47] : memref<1x128xf32, #tpu.memory_space<vmem>>, vector<1x128xf32>
    tpu.vector_store %arg6[%c0_46, %c0_47], %243 {strides = array<i32>} : memref<1x128xf32, #tpu.memory_space<vmem>>, vector<1x128xf32>,
    return
  }
  func.func @transform_0(%arg0: i32) -> (i32, i32) {
    %c0_i32 = arith.constant 0 : i32
    %c0_i32_0 = arith.constant 0 : i32
    return %arg0, %c0_i32 : i32, i32
  }
  func.func @transform_1(%arg0: i32) -> (i32, i32) {
    %c0_i32 = arith.constant 0 : i32
    %c0_i32_0 = arith.constant 0 : i32
    %c0_i32_1 = arith.constant 0 : i32
    return %c0_i32, %c0_i32_0 : i32, i32
  }
  func.func @transform_2(%arg0: i32) -> (i32, i32) {
    %c0_i32 = arith.constant 0 : i32
    %c0_i32_0 = arith.constant 0 : i32
    %c0_i32_1 = arith.constant 0 : i32
    return %c0_i32, %c0_i32_0 : i32, i32
  }
  func.func @transform_3(%arg0: i32) -> (i32, i32) {
    %c0_i32 = arith.constant 0 : i32
    %c0_i32_0 = arith.constant 0 : i32
    %c0_i32_1 = arith.constant 0 : i32
    return %c0_i32, %c0_i32_0 : i32, i32
  }
  func.func @transform_4(%arg0: i32) -> (i32, i32) {
    %c0_i32 = arith.constant 0 : i32
    %c0_i32_0 = arith.constant 0 : i32
    return %arg0, %c0_i32 : i32, i32
  }
}

</mosaic_0001>

<llo_original>
// kernel: encoder_rnn_forward.1
$region0: #{encoder_rnn_forward.1}
  #allocation0 [shape = 'u32[]', space=smem, size = 0x4, offset = 0x4, fixed_abs, tag = 'smem constant byte address 0x4 - core index']
  #allocation1 [shape = 'u32[144,128]{1,0:T(1,128)}', space=vmem, size = 0x12000, scoped, tag = 'internal scratch']
  #allocation2 [shape = 'f32[1,128]{1,0:T(1,128)}', space=vmem, size = 0x200, scoped, tag = 'scratch operand']
  %s0 = inlined_call_operand.vmem [shape: f32[16,384], index: 0, kind: input, shape index: {}]
  %s1 = inlined_call_operand.vmem [shape: f32[1,128], index: 1, kind: input, shape index: {}]
  %s2 = inlined_call_operand.vmem [shape: f32[128,384], index: 2, kind: input, shape index: {}]
  %s3 = inlined_call_operand.vmem [shape: f32[1,128], index: 3, kind: input, shape index: {}]
  %s4 = inlined_call_operand.vmem [shape: f32[16,128], index: 4, kind: output, shape index: {}]
  %s5 = sld [smem:[#allocation0]]
  $region53: #{encoder_rnn_forward.1} parent=0
    _
  %s7 = ssub.s32 1, %s5
  %s8 = scalar_select 0, %s7, %s5
  loop: start=0, step=1, limit=4
  $region2: #{encoder_rnn_forward.1} parent=0 // loop_pre_header
    _
  $region3: #{encoder_rnn_forward.1} parent=0 // loop_header
    %s10 = sphi 0, %s14
    %p11 = scmp.ge.s32.totalorder %s10, 4
    %s20 = sphi 0, %s22
    %s23 = sphi 0, %s20
    %s24 = sphi 0, %s23
    %s40 = sphi 0, %s24
    %s44 = sphi 0, %s44
    %s46 = sphi 0, %s44
    %s47 = sphi 0, %s46
    %s61 = sphi 0, %s47
    %s65 = sphi 0, %s65
    %s67 = sphi 0, %s65
    %s68 = sphi 0, %s67
    %s82 = sphi 0, %s68
    %s86 = sphi 0, %s86
    %s88 = sphi 0, %s86
    %s89 = sphi 0, %s88
    %s103 = sphi 0, %s89
    %s109 = sphi 0, %s111
    %s112 = sphi 0, %s109
    %s113 = sphi 0, %s112
    %s129 = sphi 0, %s113
  $region4: #{encoder_rnn_forward.1} parent=0 // loop_header_branch
    %13 = sbr.rel (%p11) target = $region8
  $region5: #{encoder_rnn_forward.1} parent=0 // loop_body
    %s15 = ssub.s32 %s10, 1
    %s16 = ssub.s32 %s10, 2
    %s17 = sadd.s32 %s10, 1
    %s18 = ssub.s32 %s10, %s17
    %p19 = scmp.eq.s32.totalorder %s18, 0
    %s21 = sadd.s32 %s20, 1
    %s22 = scalar_select %p19, %s20, %s21
    %p25 = pneg %p19
    %p26 = scmp.eq.s32.totalorder %s10, 1
    %p27 = por %p25, %p26
    %p28 = scmp.ne.s32.totalorder %s20, %s23
    %p29 = scmp.eq.s32.totalorder %s10, 0
    %p30 = por %p28, %p29
    %p31 = scmp.ne.s32.totalorder %s20, %s23
    %p32 = scmp.eq.s32.totalorder %s15, 1
    %p33 = por %p31, %p32
    %p34 = scmp.ne.s32.totalorder %s23, %s24
    %p35 = scmp.eq.s32.totalorder %s15, 0
    %p36 = por %p34, %p35
    %p37 = scmp.ne.s32.totalorder %s23, %s24
    %p38 = scmp.eq.s32.totalorder %s16, 1
    %p39 = por %p37, %p38
    %p41 = scmp.ne.s32.totalorder %s24, %s40
    %p42 = scmp.eq.s32.totalorder %s16, 0
    %p43 = por %p41, %p42
    %s45 = sadd.s32 %s44, 1
    %p48 = scmp.eq.s32.totalorder %s10, 1
    %p49 = scmp.ne.s32.totalorder %s44, %s46
    %p50 = scmp.eq.s32.totalorder %s10, 0
    %p51 = por %p49, %p50
    %p52 = scmp.ne.s32.totalorder %s44, %s46
    %p53 = scmp.eq.s32.totalorder %s15, 1
    %p54 = por %p52, %p53
    %p55 = scmp.ne.s32.totalorder %s46, %s47
    %p56 = scmp.eq.s32.totalorder %s15, 0
    %p57 = por %p55, %p56
    %p58 = scmp.ne.s32.totalorder %s46, %s47
    %p59 = scmp.eq.s32.totalorder %s16, 1
    %p60 = por %p58, %p59
    %p62 = scmp.ne.s32.totalorder %s47, %s61
    %p63 = scmp.eq.s32.totalorder %s16, 0
    %p64 = por %p62, %p63
    %s66 = sadd.s32 %s65, 1
    %p69 = scmp.eq.s32.totalorder %s10, 1
    %p70 = scmp.ne.s32.totalorder %s65, %s67
    %p71 = scmp.eq.s32.totalorder %s10, 0
    %p72 = por %p70, %p71
    %p73 = scmp.ne.s32.totalorder %s65, %s67
    %p74 = scmp.eq.s32.totalorder %s15, 1
    %p75 = por %p73, %p74
    %p76 = scmp.ne.s32.totalorder %s67, %s68
    %p77 = scmp.eq.s32.totalorder %s15, 0
    %p78 = por %p76, %p77
    %p79 = scmp.ne.s32.totalorder %s67, %s68
    %p80 = scmp.eq.s32.totalorder %s16, 1
    %p81 = por %p79, %p80
    %p83 = scmp.ne.s32.totalorder %s68, %s82
    %p84 = scmp.eq.s32.totalorder %s16, 0
    %p85 = por %p83, %p84
    %s87 = sadd.s32 %s86, 1
    %p90 = scmp.eq.s32.totalorder %s10, 1
    %p91 = scmp.ne.s32.totalorder %s86, %s88
    %p92 = scmp.eq.s32.totalorder %s10, 0
    %p93 = por %p91, %p92
    %p94 = scmp.ne.s32.totalorder %s86, %s88
    %p95 = scmp.eq.s32.totalorder %s15, 1
    %p96 = por %p94, %p95
    %p97 = scmp.ne.s32.totalorder %s88, %s89
    %p98 = scmp.eq.s32.totalorder %s15, 0
    %p99 = por %p97, %p98
    %p100 = scmp.ne.s32.totalorder %s88, %s89
    %p101 = scmp.eq.s32.totalorder %s16, 1
    %p102 = por %p100, %p101
    %p104 = scmp.ne.s32.totalorder %s89, %s103
    %p105 = scmp.eq.s32.totalorder %s16, 0
    %p106 = por %p104, %p105
    %s107 = ssub.s32 %s10, %s17
    %p108 = scmp.eq.s32.totalorder %s107, 0
    %s110 = sadd.s32 %s109, 1
    %s111 = scalar_select %p108, %s109, %s110
    %p114 = pneg %p108
    %p115 = scmp.eq.s32.totalorder %s10, 1
    %p116 = por %p114, %p115
    %p117 = scmp.ne.s32.totalorder %s109, %s112
    %p118 = scmp.eq.s32.totalorder %s10, 0
    %p119 = por %p117, %p118
    %p120 = scmp.ne.s32.totalorder %s109, %s112
    %p121 = scmp.eq.s32.totalorder %s15, 1
    %p122 = por %p120, %p121
    %p123 = scmp.ne.s32.totalorder %s112, %s113
    %p124 = scmp.eq.s32.totalorder %s15, 0
    %p125 = por %p123, %p124
    %p126 = scmp.ne.s32.totalorder %s112, %s113
    %p127 = scmp.eq.s32.totalorder %s16, 1
    %p128 = por %p126, %p127
    %p130 = scmp.ne.s32.totalorder %s113, %s129
    %p131 = scmp.eq.s32.totalorder %s16, 0
    %p132 = por %p130, %p131
    %p133 = scmp.le.s32.totalorder 1, %s10
    %p134 = scmp.lt.s32.totalorder %s10, 3
    %p135 = pnand %p133, %p134
    %p136 = pneg %p135
    // Predicated region
    $region9: #{encoder_rnn_forward.1} parent=5 // pred_check
      _
    $region10: #{encoder_rnn_forward.1} parent=5 // pred_check_branch
      %138 = sbr.rel (%p135) target = $region12
    $region11: #{encoder_rnn_forward.1} parent=5 // pred_region
      %s139 = ssub.s32 %s10, 1
      // Predicated region
      $region13: #{encoder_rnn_forward.1} parent=11 // pred_check
        %p140 = pneg %p57
      $region14: #{encoder_rnn_forward.1} parent=11 // pred_check_branch
        %142 = sbr.rel (%p140) target = $region16
      $region15: #{encoder_rnn_forward.1} parent=11 // pred_region
        _
      $region16: #{encoder_rnn_forward.1} parent=11 // pred_fallthru
        _
      // Predicated region
      $region17: #{encoder_rnn_forward.1} parent=11 // pred_check
        %p143 = pneg %p78
      $region18: #{encoder_rnn_forward.1} parent=11 // pred_check_branch
        %145 = sbr.rel (%p143) target = $region20
      $region19: #{encoder_rnn_forward.1} parent=11 // pred_region
        _
      $region20: #{encoder_rnn_forward.1} parent=11 // pred_fallthru
        _
      // Predicated region
      $region21: #{encoder_rnn_forward.1} parent=11 // pred_check
        %p146 = pneg %p99
      $region22: #{encoder_rnn_forward.1} parent=11 // pred_check_branch
        %148 = sbr.rel (%p146) target = $region24
      $region23: #{encoder_rnn_forward.1} parent=11 // pred_region
        _
      $region24: #{encoder_rnn_forward.1} parent=11 // pred_fallthru
        _
    $region12: #{encoder_rnn_forward.1} parent=5 // pred_fallthru
      _
    %p149 = scmp.lt.s32.totalorder %s10, 2
    // Predicated region
    $region25: #{encoder_rnn_forward.1} parent=5 // pred_check
      %p150 = pneg %p149
    $region26: #{encoder_rnn_forward.1} parent=5 // pred_check_branch
      %152 = sbr.rel (%p150) target = $region28
    $region27: #{encoder_rnn_forward.1} parent=5 // pred_region
      // Predicated region
      $region29: #{encoder_rnn_forward.1} parent=27 // pred_check
        %p153 = pneg %p30
      $region30: #{encoder_rnn_forward.1} parent=27 // pred_check_branch
        %155 = sbr.rel (%p153) target = $region32
      $region31: #{encoder_rnn_forward.1} parent=27 // pred_region
        %p156 = scmp.lt.s32.totalorder %s10, 1
        %s157 = scalar_select %p156, %s10, 1
        %s158 = smul.addr %s157, 3
        %s159 = smul.addr %s158, 8
        %s160 = scalar_lea.vmem %s0, %s159
      $region32: #{encoder_rnn_forward.1} parent=27 // pred_fallthru
        _
    $region28: #{encoder_rnn_forward.1} parent=5 // pred_fallthru
      _
    %p161 = scmp.le.s32.totalorder 1, %s10
    %p162 = scmp.lt.s32.totalorder %s10, 3
    %p163 = pnand %p161, %p162
    %p164 = pneg %p163
    // Predicated region
    $region33: #{encoder_rnn_forward.1} parent=5 // pred_check
      _
    $region34: #{encoder_rnn_forward.1} parent=5 // pred_check_branch
      %166 = sbr.rel (%p163) target = $region36
    $region35: #{encoder_rnn_forward.1} parent=5 // pred_region
      %s167 = ssub.s32 %s10, 1
      %p168 = scmp.lt.s32.totalorder %s15, 1
      %s169 = scalar_select %p168, %s15, 1
      %s170 = smul.addr %s169, 3
      %s171 = smul.addr %s170, 8
      %s172 = scalar_lea.vmem %s0, %s171
      %p173 = pneg %p36
      %p174 = pneg %p33
      %p175 = pneg %p57
      %p176 = pneg %p54
      %p177 = pneg %p78
      %p178 = pneg %p75
      %p179 = pneg %p99
      %p180 = pneg %p96
      %p181 = pneg %p125
      %p182 = pneg %p122
      %p183 = scmp.lt.s32.totalorder %s15, 1
      %s184 = scalar_select %p183, %s15, 1
      %s185 = smul.addr %s184, 8
      %s186 = scalar_lea.vmem %s4, %s185
      %p187 = scmp.lt.s32.totalorder %s15, 1
      %s188 = scalar_select %p187, %s15, 1
      %s189 = smul.addr %s188, 3
      %s190 = smul.addr %s189, 8
      %s191 = scalar_lea.vmem %s0, %s190
      %p192 = scmp.lt.s32.totalorder %s15, 1
      %s193 = scalar_select %p192, %s15, 1
      %s194 = smul.addr %s193, 8
      %s195 = scalar_lea.vmem %s4, %s194
      %p196 = scmp.eq.s32.totalorder %s15, 0
      // Predicated region
      $region37: #{encoder_rnn_forward.1} parent=35 // pred_check
        %p197 = pneg %p196
      $region38: #{encoder_rnn_forward.1} parent=35 // pred_check_branch
        %199 = sbr.rel (%p197) target = $region40
      $region39: #{encoder_rnn_forward.1} parent=35 // pred_region
        %v200 = vld [vmem:[%s1] sm:$0x1]
        %201 = vst [vmem:[#allocation2] sm:$0x1] %v200
      $region40: #{encoder_rnn_forward.1} parent=35 // pred_fallthru
        _
      %v202 = vld [vmem:[%s2] sm:$0xff]
      %v203 = vld [vmem:[%s2 + $0x8] sm:$0xff]
      %v204 = vld [vmem:[%s2 + $0x10] sm:$0xff]
      %v205 = vld [vmem:[%s2 + $0x18] sm:$0xff]
      %v206 = vld [vmem:[%s2 + $0x20] sm:$0xff]
      %v207 = vld [vmem:[%s2 + $0x28] sm:$0xff]
      %v208 = vld [vmem:[%s2 + $0x30] sm:$0xff]
      %v209 = vld [vmem:[%s2 + $0x38] sm:$0xff]
      %v210 = vld [vmem:[%s2 + $0x40] sm:$0xff]
      %v211 = vld [vmem:[%s2 + $0x48] sm:$0xff]
      %v212 = vld [vmem:[%s2 + $0x50] sm:$0xff]
      %v213 = vld [vmem:[%s2 + $0x58] sm:$0xff]
      %v214 = vld [vmem:[%s2 + $0x60] sm:$0xff]
      %v215 = vld [vmem:[%s2 + $0x68] sm:$0xff]
      %v216 = vld [vmem:[%s2 + $0x70] sm:$0xff]
      %v217 = vld [vmem:[%s2 + $0x78] sm:$0xff]
      %v218 = vld [vmem:[%s2 + $0x80] sm:$0xff]
      %v219 = vld [vmem:[%s2 + $0x88] sm:$0xff]
      %v220 = vld [vmem:[%s2 + $0x90] sm:$0xff]
      %v221 = vld [vmem:[%s2 + $0x98] sm:$0xff]
      %v222 = vld [vmem:[%s2 + $0xa0] sm:$0xff]
      %v223 = vld [vmem:[%s2 + $0xa8] sm:$0xff]
      %v224 = vld [vmem:[%s2 + $0xb0] sm:$0xff]
      %v225 = vld [vmem:[%s2 + $0xb8] sm:$0xff]
      %v226 = vld [vmem:[%s2 + $0xc0] sm:$0xff]
      %v227 = vld [vmem:[%s2 + $0xc8] sm:$0xff]
      %v228 = vld [vmem:[%s2 + $0xd0] sm:$0xff]
      %v229 = vld [vmem:[%s2 + $0xd8] sm:$0xff]
      %v230 = vld [vmem:[%s2 + $0xe0] sm:$0xff]
      %v231 = vld [vmem:[%s2 + $0xe8] sm:$0xff]
      %v232 = vld [vmem:[%s2 + $0xf0] sm:$0xff]
      %v233 = vld [vmem:[%s2 + $0xf8] sm:$0xff]
      %v234 = vld [vmem:[%s2 + $0x100] sm:$0xff]
      %v235 = vld [vmem:[%s2 + $0x108] sm:$0xff]
      %v236 = vld [vmem:[%s2 + $0x110] sm:$0xff]
      %v237 = vld [vmem:[%s2 + $0x118] sm:$0xff]
      %v238 = vld [vmem:[%s2 + $0x120] sm:$0xff]
      %v239 = vld [vmem:[%s2 + $0x128] sm:$0xff]
      %v240 = vld [vmem:[%s2 + $0x130] sm:$0xff]
      %v241 = vld [vmem:[%s2 + $0x138] sm:$0xff]
      %v242 = vld [vmem:[%s2 + $0x140] sm:$0xff]
      %v243 = vld [vmem:[%s2 + $0x148] sm:$0xff]
      %v244 = vld [vmem:[%s2 + $0x150] sm:$0xff]
      %v245 = vld [vmem:[%s2 + $0x158] sm:$0xff]
      %v246 = vld [vmem:[%s2 + $0x160] sm:$0xff]
      %v247 = vld [vmem:[%s2 + $0x168] sm:$0xff]
      %v248 = vld [vmem:[%s2 + $0x170] sm:$0xff]
      %v249 = vld [vmem:[%s2 + $0x178] sm:$0xff]
      %v250 = vld [vmem:[%s3] sm:$0x1]
      %v251 = vld [vmem:[#allocation2] sm:$0x1]
      %v252 = vld [vmem:[%s191] ss:$8 sm:$0x7]
      %253 = vmatprep.subr.mxu0 %v203
      %254 = vmatpush1.msra.mxu0 %v202
      %255 = vmatprep.subr.mxu0 %v206
      %256 = vmatpush1.msra.mxu0 %v205
      %257 = vmatprep.subr.mxu0 %v209
      %258 = vmatpush1.msra.mxu0 %v208
      %259 = vmatprep.subr.mxu0 %v212
      %260 = vmatpush1.msra.mxu0 %v211
      %261 = vmatprep.subr.mxu0 %v215
      %262 = vmatpush1.msra.mxu0 %v214
      %263 = vmatprep.subr.mxu0 %v218
      %264 = vmatpush1.msra.mxu0 %v217
      %265 = vmatprep.subr.mxu0 %v221
      %266 = vmatpush1.msra.mxu0 %v220
      %267 = vmatprep.subr.mxu0 %v224
      %268 = vmatpush1.msra.mxu0 %v223
      %269 = vmatprep.subr.mxu0 %v227
      %270 = vmatpush1.msra.mxu0 %v226
      %271 = vmatprep.subr.mxu0 %v230
      %272 = vmatpush1.msra.mxu0 %v229
      %273 = vmatprep.subr.mxu0 %v233
      %274 = vmatpush1.msra.mxu0 %v232
      %275 = vmatprep.subr.mxu0 %v236
      %276 = vmatpush1.msra.mxu0 %v235
      %277 = vmatprep.subr.mxu0 %v239
      %278 = vmatpush1.msra.mxu0 %v238
      %279 = vmatprep.subr.mxu0 %v242
      %280 = vmatpush1.msra.mxu0 %v241
      %281 = vmatprep.subr.mxu0 %v245
      %282 = vmatpush1.msra.mxu0 %v244
      %283 = vmatprep.subr.mxu0 %v248
      %284 = vmatpush1.msra.mxu0 %v247
      %285 = vmatprep.subr.mxu0 0.0
      %286 = vmatpush1.msra.mxu0 0.0
      %287 = vmatprep.subr.mxu0 0.0
      %288 = vmatpush1.msra.mxu0 0.0
      %289 = vmatprep.subr.mxu0 0.0
      %290 = vmatpush1.msra.mxu0 0.0
      %291 = vmatprep.subr.mxu0 0.0
      %292 = vmatpush1.msra.mxu0 0.0
      %293 = vmatprep.subr.mxu0 0.0
      %294 = vmatpush1.msra.mxu0 0.0
      %295 = vmatprep.subr.mxu0 0.0
      %296 = vmatpush1.msra.mxu0 0.0
      %297 = vmatprep.subr.mxu0 0.0
      %298 = vmatpush1.msra.mxu0 0.0
      %299 = vmatprep.subr.mxu0 0.0
      %300 = vmatpush1.msra.mxu0 0.0
      %301 = vmatprep.subr.mxu0 0.0
      %302 = vmatpush1.msra.mxu0 0.0
      %303 = vmatprep.subr.mxu0 0.0
      %304 = vmatpush1.msra.mxu0 0.0
      %305 = vmatprep.subr.mxu0 0.0
      %306 = vmatpush1.msra.mxu0 0.0
      %307 = vmatprep.subr.mxu0 0.0
      %308 = vmatpush1.msra.mxu0 0.0
      %309 = vmatprep.subr.mxu0 0.0
      %310 = vmatpush1.msra.mxu0 0.0
      %311 = vmatprep.subr.mxu0 0.0
      %312 = vmatpush1.msra.mxu0 0.0
      %313 = vmatprep.subr.mxu0 0.0
      %314 = vmatpush1.msra.mxu0 0.0
      %315 = vmatprep.subr.mxu0 0.0
      %316 = vmatpush1.msra.mxu0 0.0
      %317 = vmatprep.mubr.f32.mxu0 0.0
      %318 = vmatmul.mubr.f32.gmra.mrb[0].mxu0 %v251
      %v319 = vpop.f32.mrb[0].mxu0
      %v320 = vadd.f32 0.0, %v319
      %v321 = vpop.f32.mrb[0].mxu0
      %v322 = vadd.f32 0.0, %v321
      %323 = vdwg.mxu0
      %324 = vmatprep.subr.mxu0 0.0
      %325 = vmatpush1.msra.mxu0 %v204
      %326 = vmatprep.subr.mxu0 0.0
      %327 = vmatpush1.msra.mxu0 %v207
      %328 = vmatprep.subr.mxu0 0.0
      %329 = vmatpush1.msra.mxu0 %v210
      %330 = vmatprep.subr.mxu0 0.0
      %331 = vmatpush1.msra.mxu0 %v213
      %332 = vmatprep.subr.mxu0 0.0
      %333 = vmatpush1.msra.mxu0 %v216
      %334 = vmatprep.subr.mxu0 0.0
      %335 = vmatpush1.msra.mxu0 %v219
      %336 = vmatprep.subr.mxu0 0.0
      %337 = vmatpush1.msra.mxu0 %v222
      %338 = vmatprep.subr.mxu0 0.0
      %339 = vmatpush1.msra.mxu0 %v225
      %340 = vmatprep.subr.mxu0 0.0
      %341 = vmatpush1.msra.mxu0 %v228
      %342 = vmatprep.subr.mxu0 0.0
      %343 = vmatpush1.msra.mxu0 %v231
      %344 = vmatprep.subr.mxu0 0.0
      %345 = vmatpush1.msra.mxu0 %v234
      %346 = vmatprep.subr.mxu0 0.0
      %347 = vmatpush1.msra.mxu0 %v237
      %348 = vmatprep.subr.mxu0 0.0
      %349 = vmatpush1.msra.mxu0 %v240
      %350 = vmatprep.subr.mxu0 0.0
      %351 = vmatpush1.msra.mxu0 %v243
      %352 = vmatprep.subr.mxu0 0.0
      %353 = vmatpush1.msra.mxu0 %v246
      %354 = vmatprep.subr.mxu0 0.0
      %355 = vmatpush1.msra.mxu0 %v249
      %356 = vmatprep.subr.mxu0 0.0
      %357 = vmatpush1.msra.mxu0 0.0
      %358 = vmatprep.subr.mxu0 0.0
      %359 = vmatpush1.msra.mxu0 0.0
      %360 = vmatprep.subr.mxu0 0.0
      %361 = vmatpush1.msra.mxu0 0.0
      %362 = vmatprep.subr.mxu0 0.0
      %363 = vmatpush1.msra.mxu0 0.0
      %364 = vmatprep.subr.mxu0 0.0
      %365 = vmatpush1.msra.mxu0 0.0
      %366 = vmatprep.subr.mxu0 0.0
      %367 = vmatpush1.msra.mxu0 0.0
      %368 = vmatprep.subr.mxu0 0.0
      %369 = vmatpush1.msra.mxu0 0.0
      %370 = vmatprep.subr.mxu0 0.0
      %371 = vmatpush1.msra.mxu0 0.0
      %372 = vmatprep.subr.mxu0 0.0
      %373 = vmatpush1.msra.mxu0 0.0
      %374 = vmatprep.subr.mxu0 0.0
      %375 = vmatpush1.msra.mxu0 0.0
      %376 = vmatprep.subr.mxu0 0.0
      %377 = vmatpush1.msra.mxu0 0.0
      %378 = vmatprep.subr.mxu0 0.0
      %379 = vmatpush1.msra.mxu0 0.0
      %380 = vmatprep.subr.mxu0 0.0
      %381 = vmatpush1.msra.mxu0 0.0
      %382 = vmatprep.subr.mxu0 0.0
      %383 = vmatpush1.msra.mxu0 0.0
      %384 = vmatprep.subr.mxu0 0.0
      %385 = vmatpush1.msra.mxu0 0.0
      %386 = vmatprep.subr.mxu0 0.0
      %387 = vmatpush1.msra.mxu0 0.0
      %388 = vmatprep.mubr.f32.mxu0 0.0
      %389 = vmatmul.mubr.f32.gmra.mrb[0].mxu0 %v251
      %v390 = vpop.f32.mrb[0].mxu0
      %v391 = vadd.f32 0.0, %v390
      %v392 = vpop.f32.mrb[0].mxu0
      %393 = vdwg.mxu0
      %v394 = vadd.f32 %v252, %v320
      %v395 = vxor.u32 %v394, 2147483648
      %v396 = vmul.f32 %v395, 1.442695
      %v397 = vpow.pop %v396
      %v398 = vadd.f32 %v397, 1.0
      %v399 = vrcp.pop %v398
      %v400 = vmul.f32 1.0, %v399
      %v402 = vrot.slane %v252, 1
      %v404 = vadd.f32 %v402, %v322
      %v405 = vxor.u32 %v404, 2147483648
      %v406 = vmul.f32 %v405, 1.442695
      %v407 = vpow.pop %v406
      %v408 = vadd.f32 %v407, 1.0
      %v409 = vrcp.pop %v408
      %v410 = vmul.f32 1.0, %v409
      %v411 = vadd.f32 %v391, %v250
      %v412 = vmul.f32 %v400, %v411
      %v413 = vrot.slane %v252, 2
      %v415 = vadd.f32 %v413, %v412
      %v416 = vtanh.pop %v415
      %v417 = vsub.f32 %v251, %v416
      %v418 = vmul.f32 %v410, %v417
      %v419 = vadd.f32 %v416, %v418
      %420 = vst [vmem:[%s195] sm:$0x1] %v419
      %s421 = scalar_lea.vmem %s191, 1
      %v422 = vld [vmem:[%s421] ss:$8 sm:$0x7]
      %423 = vmatprep.subr.mxu0 %v203
      %424 = vmatpush1.msra.mxu0 %v202
      %425 = vmatprep.subr.mxu0 %v206
      %426 = vmatpush1.msra.mxu0 %v205
      %427 = vmatprep.subr.mxu0 %v209
      %428 = vmatpush1.msra.mxu0 %v208
      %429 = vmatprep.subr.mxu0 %v212
      %430 = vmatpush1.msra.mxu0 %v211
      %431 = vmatprep.subr.mxu0 %v215
      %432 = vmatpush1.msra.mxu0 %v214
      %433 = vmatprep.subr.mxu0 %v218
      %434 = vmatpush1.msra.mxu0 %v217
      %435 = vmatprep.subr.mxu0 %v221
      %436 = vmatpush1.msra.mxu0 %v220
      %437 = vmatprep.subr.mxu0 %v224
      %438 = vmatpush1.msra.mxu0 %v223
      %439 = vmatprep.subr.mxu0 %v227
      %440 = vmatpush1.msra.mxu0 %v226
      %441 = vmatprep.subr.mxu0 %v230
      %442 = vmatpush1.msra.mxu0 %v229
      %443 = vmatprep.subr.mxu0 %v233
      %444 = vmatpush1.msra.mxu0 %v232
      %445 = vmatprep.subr.mxu0 %v236
      %446 = vmatpush1.msra.mxu0 %v235
      %447 = vmatprep.subr.mxu0 %v239
      %448 = vmatpush1.msra.mxu0 %v238
      %449 = vmatprep.subr.mxu0 %v242
      %450 = vmatpush1.msra.mxu0 %v241
      %451 = vmatprep.subr.mxu0 %v245
      %452 = vmatpush1.msra.mxu0 %v244
      %453 = vmatprep.subr.mxu0 %v248
      %454 = vmatpush1.msra.mxu0 %v247
      %455 = vmatprep.subr.mxu0 0.0
      %456 = vmatpush1.msra.mxu0 0.0
      %457 = vmatprep.subr.mxu0 0.0
      %458 = vmatpush1.msra.mxu0 0.0
      %459 = vmatprep.subr.mxu0 0.0
      %460 = vmatpush1.msra.mxu0 0.0
      %461 = vmatprep.subr.mxu0 0.0
      %462 = vmatpush1.msra.mxu0 0.0
      %463 = vmatprep.subr.mxu0 0.0
      %464 = vmatpush1.msra.mxu0 0.0
      %465 = vmatprep.subr.mxu0 0.0
      %466 = vmatpush1.msra.mxu0 0.0
      %467 = vmatprep.subr.mxu0 0.0
      %468 = vmatpush1.msra.mxu0 0.0
      %469 = vmatprep.subr.mxu0 0.0
      %470 = vmatpush1.msra.mxu0 0.0
      %471 = vmatprep.subr.mxu0 0.0
      %472 = vmatpush1.msra.mxu0 0.0
      %473 = vmatprep.subr.mxu0 0.0
      %474 = vmatpush1.msra.mxu0 0.0
      %475 = vmatprep.subr.mxu0 0.0
      %476 = vmatpush1.msra.mxu0 0.0
      %477 = vmatprep.subr.mxu0 0.0
      %478 = vmatpush1.msra.mxu0 0.0
      %479 = vmatprep.subr.mxu0 0.0
      %480 = vmatpush1.msra.mxu0 0.0
      %481 = vmatprep.subr.mxu0 0.0
      %482 = vmatpush1.msra.mxu0 0.0
      %483 = vmatprep.subr.mxu0 0.0
      %484 = vmatpush1.msra.mxu0 0.0
      %485 = vmatprep.subr.mxu0 0.0
      %486 = vmatpush1.msra.mxu0 0.0
      %487 = vmatprep.mubr.f32.mxu0 0.0
      %488 = vmatmul.mubr.f32.gmra.mrb[0].mxu0 %v419
      %v489 = vpop.f32.mrb[0].mxu0
      %v490 = vadd.f32 0.0, %v489
      %v491 = vpop.f32.mrb[0].mxu0
      %v492 = vadd.f32 0.0, %v491
      %493 = vdwg.mxu0
      %494 = vmatprep.subr.mxu0 0.0
      %495 = vmatpush1.msra.mxu0 %v204
      %496 = vmatprep.subr.mxu0 0.0
      %497 = vmatpush1.msra.mxu0 %v207
      %498 = vmatprep.subr.mxu0 0.0
      %499 = vmatpush1.msra.mxu0 %v210
      %500 = vmatprep.subr.mxu0 0.0
      %501 = vmatpush1.msra.mxu0 %v213
      %502 = vmatprep.subr.mxu0 0.0
      %503 = vmatpush1.msra.mxu0 %v216
      %504 = vmatprep.subr.mxu0 0.0
      %505 = vmatpush1.msra.mxu0 %v219
      %506 = vmatprep.subr.mxu0 0.0
      %507 = vmatpush1.msra.mxu0 %v222
      %508 = vmatprep.subr.mxu0 0.0
      %509 = vmatpush1.msra.mxu0 %v225
      %510 = vmatprep.subr.mxu0 0.0
      %511 = vmatpush1.msra.mxu0 %v228
      %512 = vmatprep.subr.mxu0 0.0
      %513 = vmatpush1.msra.mxu0 %v231
      %514 = vmatprep.subr.mxu0 0.0
      %515 = vmatpush1.msra.mxu0 %v234
      %516 = vmatprep.subr.mxu0 0.0
      %517 = vmatpush1.msra.mxu0 %v237
      %518 = vmatprep.subr.mxu0 0.0
      %519 = vmatpush1.msra.mxu0 %v240
      %520 = vmatprep.subr.mxu0 0.0
      %521 = vmatpush1.msra.mxu0 %v243
      %522 = vmatprep.subr.mxu0 0.0
      %523 = vmatpush1.msra.mxu0 %v246
      %524 = vmatprep.subr.mxu0 0.0
      %525 = vmatpush1.msra.mxu0 %v249
      %526 = vmatprep.subr.mxu0 0.0
      %527 = vmatpush1.msra.mxu0 0.0
      %528 = vmatprep.subr.mxu0 0.0
      %529 = vmatpush1.msra.mxu0 0.0
      %530 = vmatprep.subr.mxu0 0.0
      %531 = vmatpush1.msra.mxu0 0.0
      %532 = vmatprep.subr.mxu0 0.0
      %533 = vmatpush1.msra.mxu0 0.0
      %534 = vmatprep.subr.mxu0 0.0
      %535 = vmatpush1.msra.mxu0 0.0
      %536 = vmatprep.subr.mxu0 0.0
      %537 = vmatpush1.msra.mxu0 0.0
      %538 = vmatprep.subr.mxu0 0.0
      %539 = vmatpush1.msra.mxu0 0.0
      %540 = vmatprep.subr.mxu0 0.0
      %541 = vmatpush1.msra.mxu0 0.0
      %542 = vmatprep.subr.mxu0 0.0
      %543 = vmatpush1.msra.mxu0 0.0
      %544 = vmatprep.subr.mxu0 0.0
      %545 = vmatpush1.msra.mxu0 0.0
      %546 = vmatprep.subr.mxu0 0.0
      %547 = vmatpush1.msra.mxu0 0.0
      %548 = vmatprep.subr.mxu0 0.0
      %549 = vmatpush1.msra.mxu0 0.0
      %550 = vmatprep.subr.mxu0 0.0
      %551 = vmatpush1.msra.mxu0 0.0
      %552 = vmatprep.subr.mxu0 0.0
      %553 = vmatpush1.msra.mxu0 0.0
      %554 = vmatprep.subr.mxu0 0.0
      %555 = vmatpush1.msra.mxu0 0.0
      %556 = vmatprep.subr.mxu0 0.0
      %557 = vmatpush1.msra.mxu0 0.0
      %558 = vmatprep.mubr.f32.mxu0 0.0
      %559 = vmatmul.mubr.f32.gmra.mrb[0].mxu0 %v419
      %v560 = vpop.f32.mrb[0].mxu0
      %v561 = vadd.f32 0.0, %v560
      %v562 = vpop.f32.mrb[0].mxu0
      %563 = vdwg.mxu0
      %v564 = vadd.f32 %v422, %v490
      %v565 = vxor.u32 %v564, 2147483648
      %v566 = vmul.f32 %v565, 1.442695
      %v567 = vpow.pop %v566
      %v568 = vadd.f32 %v567, 1.0
      %v569 = vrcp.pop %v568
      %v570 = vmul.f32 1.0, %v569
      %v572 = vrot.slane %v422, 1
      %v574 = vadd.f32 %v572, %v492
      %v575 = vxor.u32 %v574, 2147483648
      %v576 = vmul.f32 %v575, 1.442695
      %v577 = vpow.pop %v576
      %v578 = vadd.f32 %v577, 1.0
      %v579 = vrcp.pop %v578
      %v580 = vmul.f32 1.0, %v579
      %v581 = vadd.f32 %v561, %v250
      %v582 = vmul.f32 %v570, %v581
      %v583 = vrot.slane %v422, 2
      %v585 = vadd.f32 %v583, %v582
      %v586 = vtanh.pop %v585
      %v587 = vsub.f32 %v419, %v586
      %v588 = vmul.f32 %v580, %v587
      %v589 = vadd.f32 %v586, %v588
      %590 = vst [vmem:[%s195 + $0x1] sm:$0x1] %v589
      %s591 = scalar_lea.vmem %s191, 2
      %v592 = vld [vmem:[%s591] ss:$8 sm:$0x7]
      %593 = vmatprep.subr.mxu0 %v203
      %594 = vmatpush1.msra.mxu0 %v202
      %595 = vmatprep.subr.mxu0 %v206
      %596 = vmatpush1.msra.mxu0 %v205
      %597 = vmatprep.subr.mxu0 %v209
      %598 = vmatpush1.msra.mxu0 %v208
      %599 = vmatprep.subr.mxu0 %v212
      %600 = vmatpush1.msra.mxu0 %v211
      %601 = vmatprep.subr.mxu0 %v215
      %602 = vmatpush1.msra.mxu0 %v214
      %603 = vmatprep.subr.mxu0 %v218
      %604 = vmatpush1.msra.mxu0 %v217
      %605 = vmatprep.subr.mxu0 %v221
      %606 = vmatpush1.msra.mxu0 %v220
      %607 = vmatprep.subr.mxu0 %v224
      %608 = vmatpush1.msra.mxu0 %v223
      %609 = vmatprep.subr.mxu0 %v227
      %610 = vmatpush1.msra.mxu0 %v226
      %611 = vmatprep.subr.mxu0 %v230
      %612 = vmatpush1.msra.mxu0 %v229
      %613 = vmatprep.subr.mxu0 %v233
      %614 = vmatpush1.msra.mxu0 %v232
      %615 = vmatprep.subr.mxu0 %v236
      %616 = vmatpush1.msra.mxu0 %v235
      %617 = vmatprep.subr.mxu0 %v239
      %618 = vmatpush1.msra.mxu0 %v238
      %619 = vmatprep.subr.mxu0 %v242
      %620 = vmatpush1.msra.mxu0 %v241
      %621 = vmatprep.subr.mxu0 %v245
      %622 = vmatpush1.msra.mxu0 %v244
      %623 = vmatprep.subr.mxu0 %v248
      %624 = vmatpush1.msra.mxu0 %v247
      %625 = vmatprep.subr.mxu0 0.0
      %626 = vmatpush1.msra.mxu0 0.0
      %627 = vmatprep.subr.mxu0 0.0
      %628 = vmatpush1.msra.mxu0 0.0
      %629 = vmatprep.subr.mxu0 0.0
      %630 = vmatpush1.msra.mxu0 0.0
      %631 = vmatprep.subr.mxu0 0.0
      %632 = vmatpush1.msra.mxu0 0.0
      %633 = vmatprep.subr.mxu0 0.0
      %634 = vmatpush1.msra.mxu0 0.0
      %635 = vmatprep.subr.mxu0 0.0
      %636 = vmatpush1.msra.mxu0 0.0
      %637 = vmatprep.subr.mxu0 0.0
      %638 = vmatpush1.msra.mxu0 0.0
      %639 = vmatprep.subr.mxu0 0.0
      %640 = vmatpush1.msra.mxu0 0.0
      %641 = vmatprep.subr.mxu0 0.0
      %642 = vmatpush1.msra.mxu0 0.0
      %643 = vmatprep.subr.mxu0 0.0
      %644 = vmatpush1.msra.mxu0 0.0
      %645 = vmatprep.subr.mxu0 0.0
      %646 = vmatpush1.msra.mxu0 0.0
      %647 = vmatprep.subr.mxu0 0.0
      %648 = vmatpush1.msra.mxu0 0.0
      %649 = vmatprep.subr.mxu0 0.0
      %650 = vmatpush1.msra.mxu0 0.0
      %651 = vmatprep.subr.mxu0 0.0
      %652 = vmatpush1.msra.mxu0 0.0
      %653 = vmatprep.subr.mxu0 0.0
      %654 = vmatpush1.msra.mxu0 0.0
      %655 = vmatprep.subr.mxu0 0.0
      %656 = vmatpush1.msra.mxu0 0.0
      %657 = vmatprep.mubr.f32.mxu0 0.0
      %658 = vmatmul.mubr.f32.gmra.mrb[0].mxu0 %v589
      %v659 = vpop.f32.mrb[0].mxu0
      %v660 = vadd.f32 0.0, %v659
      %v661 = vpop.f32.mrb[0].mxu0
      %v662 = vadd.f32 0.0, %v661
      %663 = vdwg.mxu0
      %664 = vmatprep.subr.mxu0 0.0
      %665 = vmatpush1.msra.mxu0 %v204
      %666 = vmatprep.subr.mxu0 0.0
      %667 = vmatpush1.msra.mxu0 %v207
      %668 = vmatprep.subr.mxu0 0.0
      %669 = vmatpush1.msra.mxu0 %v210
      %670 = vmatprep.subr.mxu0 0.0
      %671 = vmatpush1.msra.mxu0 %v213
      %672 = vmatprep.subr.mxu0 0.0
      %673 = vmatpush1.msra.mxu0 %v216
      %674 = vmatprep.subr.mxu0 0.0
      %675 = vmatpush1.msra.mxu0 %v219
      %676 = vmatprep.subr.mxu0 0.0
      %677 = vmatpush1.msra.mxu0 %v222
      %678 = vmatprep.subr.mxu0 0.0
      %679 = vmatpush1.msra.mxu0 %v225
      %680 = vmatprep.subr.mxu0 0.0
      %681 = vmatpush1.msra.mxu0 %v228
      %682 = vmatprep.subr.mxu0 0.0
      %683 = vmatpush1.msra.mxu0 %v231
      %684 = vmatprep.subr.mxu0 0.0
      %685 = vmatpush1.msra.mxu0 %v234
      %686 = vmatprep.subr.mxu0 0.0
      %687 = vmatpush1.msra.mxu0 %v237
      %688 = vmatprep.subr.mxu0 0.0
      %689 = vmatpush1.msra.mxu0 %v240
      %690 = vmatprep.subr.mxu0 0.0
      %691 = vmatpush1.msra.mxu0 %v243
      %692 = vmatprep.subr.mxu0 0.0
      %693 = vmatpush1.msra.mxu0 %v246
      %694 = vmatprep.subr.mxu0 0.0
      %695 = vmatpush1.msra.mxu0 %v249
      %696 = vmatprep.subr.mxu0 0.0
      %697 = vmatpush1.msra.mxu0 0.0
      %698 = vmatprep.subr.mxu0 0.0
      %699 = vmatpush1.msra.mxu0 0.0
      %700 = vmatprep.subr.mxu0 0.0
      %701 = vmatpush1.msra.mxu0 0.0
      %702 = vmatprep.subr.mxu0 0.0
      %703 = vmatpush1.msra.mxu0 0.0
      %704 = vmatprep.subr.mxu0 0.0
      %705 = vmatpush1.msra.mxu0 0.0
      %706 = vmatprep.subr.mxu0 0.0
      %707 = vmatpush1.msra.mxu0 0.0
      %708 = vmatprep.subr.mxu0 0.0
      %709 = vmatpush1.msra.mxu0 0.0
      %710 = vmatprep.subr.mxu0 0.0
      %711 = vmatpush1.msra.mxu0 0.0
      %712 = vmatprep.subr.mxu0 0.0
      %713 = vmatpush1.msra.mxu0 0.0
      %714 = vmatprep.subr.mxu0 0.0
      %715 = vmatpush1.msra.mxu0 0.0
      %716 = vmatprep.subr.mxu0 0.0
      %717 = vmatpush1.msra.mxu0 0.0
      %718 = vmatprep.subr.mxu0 0.0
      %719 = vmatpush1.msra.mxu0 0.0
      %720 = vmatprep.subr.mxu0 0.0
      %721 = vmatpush1.msra.mxu0 0.0
      %722 = vmatprep.subr.mxu0 0.0
      %723 = vmatpush1.msra.mxu0 0.0
      %724 = vmatprep.subr.mxu0 0.0
      %725 = vmatpush1.msra.mxu0 0.0
      %726 = vmatprep.subr.mxu0 0.0
      %727 = vmatpush1.msra.mxu0 0.0
      %728 = vmatprep.mubr.f32.mxu0 0.0
      %729 = vmatmul.mubr.f32.gmra.mrb[0].mxu0 %v589
      %v730 = vpop.f32.mrb[0].mxu0
      %v731 = vadd.f32 0.0, %v730
      %v732 = vpop.f32.mrb[0].mxu0
      %733 = vdwg.mxu0
      %v734 = vadd.f32 %v592, %v660
      %v735 = vxor.u32 %v734, 2147483648
      %v736 = vmul.f32 %v735, 1.442695
      %v737 = vpow.pop %v736
      %v738 = vadd.f32 %v737, 1.0
      %v739 = vrcp.pop %v738
      %v740 = vmul.f32 1.0, %v739
      %v742 = vrot.slane %v592, 1
      %v744 = vadd.f32 %v742, %v662
      %v745 = vxor.u32 %v744, 2147483648
      %v746 = vmul.f32 %v745, 1.442695
      %v747 = vpow.pop %v746
      %v748 = vadd.f32 %v747, 1.0
      %v749 = vrcp.pop %v748
      %v750 = vmul.f32 1.0, %v749
      %v751 = vadd.f32 %v731, %v250
      %v752 = vmul.f32 %v740, %v751
      %v753 = vrot.slane %v592, 2
      %v755 = vadd.f32 %v753, %v752
      %v756 = vtanh.pop %v755
      %v757 = vsub.f32 %v589, %v756
      %v758 = vmul.f32 %v750, %v757
      %v759 = vadd.f32 %v756, %v758
      %760 = vst [vmem:[%s195 + $0x2] sm:$0x1] %v759
      %s761 = scalar_lea.vmem %s191, 3
      %v762 = vld [vmem:[%s761] ss:$8 sm:$0x7]
      %763 = vmatprep.subr.mxu0 %v203
      %764 = vmatpush1.msra.mxu0 %v202
      %765 = vmatprep.subr.mxu0 %v206
      %766 = vmatpush1.msra.mxu0 %v205
      %767 = vmatprep.subr.mxu0 %v209
      %768 = vmatpush1.msra.mxu0 %v208
      %769 = vmatprep.subr.mxu0 %v212
      %770 = vmatpush1.msra.mxu0 %v211
      %771 = vmatprep.subr.mxu0 %v215
      %772 = vmatpush1.msra.mxu0 %v214
      %773 = vmatprep.subr.mxu0 %v218
      %774 = vmatpush1.msra.mxu0 %v217
      %775 = vmatprep.subr.mxu0 %v221
      %776 = vmatpush1.msra.mxu0 %v220
      %777 = vmatprep.subr.mxu0 %v224
      %778 = vmatpush1.msra.mxu0 %v223
      %779 = vmatprep.subr.mxu0 %v227
      %780 = vmatpush1.msra.mxu0 %v226
      %781 = vmatprep.subr.mxu0 %v230
      %782 = vmatpush1.msra.mxu0 %v229
      %783 = vmatprep.subr.mxu0 %v233
      %784 = vmatpush1.msra.mxu0 %v232
      %785 = vmatprep.subr.mxu0 %v236
      %786 = vmatpush1.msra.mxu0 %v235
      %787 = vmatprep.subr.mxu0 %v239
      %788 = vmatpush1.msra.mxu0 %v238
      %789 = vmatprep.subr.mxu0 %v242
      %790 = vmatpush1.msra.mxu0 %v241
      %791 = vmatprep.subr.mxu0 %v245
      %792 = vmatpush1.msra.mxu0 %v244
      %793 = vmatprep.subr.mxu0 %v248
      %794 = vmatpush1.msra.mxu0 %v247
      %795 = vmatprep.subr.mxu0 0.0
      %796 = vmatpush1.msra.mxu0 0.0
      %797 = vmatprep.subr.mxu0 0.0
      %798 = vmatpush1.msra.mxu0 0.0
      %799 = vmatprep.subr.mxu0 0.0
      %800 = vmatpush1.msra.mxu0 0.0
      %801 = vmatprep.subr.mxu0 0.0
      %802 = vmatpush1.msra.mxu0 0.0
      %803 = vmatprep.subr.mxu0 0.0
      %804 = vmatpush1.msra.mxu0 0.0
      %805 = vmatprep.subr.mxu0 0.0
      %806 = vmatpush1.msra.mxu0 0.0
      %807 = vmatprep.subr.mxu0 0.0
      %808 = vmatpush1.msra.mxu0 0.0
      %809 = vmatprep.subr.mxu0 0.0
      %810 = vmatpush1.msra.mxu0 0.0
      %811 = vmatprep.subr.mxu0 0.0
      %812 = vmatpush1.msra.mxu0 0.0
      %813 = vmatprep.subr.mxu0 0.0
      %814 = vmatpush1.msra.mxu0 0.0
      %815 = vmatprep.subr.mxu0 0.0
      %816 = vmatpush1.msra.mxu0 0.0
      %817 = vmatprep.subr.mxu0 0.0
      %818 = vmatpush1.msra.mxu0 0.0
      %819 = vmatprep.subr.mxu0 0.0
      %820 = vmatpush1.msra.mxu0 0.0
      %821 = vmatprep.subr.mxu0 0.0
      %822 = vmatpush1.msra.mxu0 0.0
      %823 = vmatprep.subr.mxu0 0.0
      %824 = vmatpush1.msra.mxu0 0.0
      %825 = vmatprep.subr.mxu0 0.0
      %826 = vmatpush1.msra.mxu0 0.0
      %827 = vmatprep.mubr.f32.mxu0 0.0
      %828 = vmatmul.mubr.f32.gmra.mrb[0].mxu0 %v759
      %v829 = vpop.f32.mrb[0].mxu0
      %v830 = vadd.f32 0.0, %v829
      %v831 = vpop.f32.mrb[0].mxu0
      %v832 = vadd.f32 0.0, %v831
      %833 = vdwg.mxu0
      %834 = vmatprep.subr.mxu0 0.0
      %835 = vmatpush1.msra.mxu0 %v204
      %836 = vmatprep.subr.mxu0 0.0
      %837 = vmatpush1.msra.mxu0 %v207
      %838 = vmatprep.subr.mxu0 0.0
      %839 = vmatpush1.msra.mxu0 %v210
      %840 = vmatprep.subr.mxu0 0.0
      %841 = vmatpush1.msra.mxu0 %v213
      %842 = vmatprep.subr.mxu0 0.0
      %843 = vmatpush1.msra.mxu0 %v216
      %844 = vmatprep.subr.mxu0 0.0
      %845 = vmatpush1.msra.mxu0 %v219
      %846 = vmatprep.subr.mxu0 0.0
      %847 = vmatpush1.msra.mxu0 %v222
      %848 = vmatprep.subr.mxu0 0.0
      %849 = vmatpush1.msra.mxu0 %v225
      %850 = vmatprep.subr.mxu0 0.0
      %851 = vmatpush1.msra.mxu0 %v228
      %852 = vmatprep.subr.mxu0 0.0
      %853 = vmatpush1.msra.mxu0 %v231
      %854 = vmatprep.subr.mxu0 0.0
      %855 = vmatpush1.msra.mxu0 %v234
      %856 = vmatprep.subr.mxu0 0.0
      %857 = vmatpush1.msra.mxu0 %v237
      %858 = vmatprep.subr.mxu0 0.0
      %859 = vmatpush1.msra.mxu0 %v240
      %860 = vmatprep.subr.mxu0 0.0
      %861 = vmatpush1.msra.mxu0 %v243
      %862 = vmatprep.subr.mxu0 0.0
      %863 = vmatpush1.msra.mxu0 %v246
      %864 = vmatprep.subr.mxu0 0.0
      %865 = vmatpush1.msra.mxu0 %v249
      %866 = vmatprep.subr.mxu0 0.0
      %867 = vmatpush1.msra.mxu0 0.0
      %868 = vmatprep.subr.mxu0 0.0
      %869 = vmatpush1.msra.mxu0 0.0
      %870 = vmatprep.subr.mxu0 0.0
      %871 = vmatpush1.msra.mxu0 0.0
      %872 = vmatprep.subr.mxu0 0.0
      %873 = vmatpush1.msra.mxu0 0.0
      %874 = vmatprep.subr.mxu0 0.0
      %875 = vmatpush1.msra.mxu0 0.0
      %876 = vmatprep.subr.mxu0 0.0
      %877 = vmatpush1.msra.mxu0 0.0
      %878 = vmatprep.subr.mxu0 0.0
      %879 = vmatpush1.msra.mxu0 0.0
      %880 = vmatprep.subr.mxu0 0.0
      %881 = vmatpush1.msra.mxu0 0.0
      %882 = vmatprep.subr.mxu0 0.0
      %883 = vmatpush1.msra.mxu0 0.0
      %884 = vmatprep.subr.mxu0 0.0
      %885 = vmatpush1.msra.mxu0 0.0
      %886 = vmatprep.subr.mxu0 0.0
      %887 = vmatpush1.msra.mxu0 0.0
      %888 = vmatprep.subr.mxu0 0.0
      %889 = vmatpush1.msra.mxu0 0.0
      %890 = vmatprep.subr.mxu0 0.0
      %891 = vmatpush1.msra.mxu0 0.0
      %892 = vmatprep.subr.mxu0 0.0
      %893 = vmatpush1.msra.mxu0 0.0
      %894 = vmatprep.subr.mxu0 0.0
      %895 = vmatpush1.msra.mxu0 0.0
      %896 = vmatprep.subr.mxu0 0.0
      %897 = vmatpush1.msra.mxu0 0.0
      %898 = vmatprep.mubr.f32.mxu0 0.0
      %899 = vmatmul.mubr.f32.gmra.mrb[0].mxu0 %v759
      %v900 = vpop.f32.mrb[0].mxu0
      %v901 = vadd.f32 0.0, %v900
      %v902 = vpop.f32.mrb[0].mxu0
      %903 = vdwg.mxu0
      %v904 = vadd.f32 %v762, %v830
      %v905 = vxor.u32 %v904, 2147483648
      %v906 = vmul.f32 %v905, 1.442695
      %v907 = vpow.pop %v906
      %v908 = vadd.f32 %v907, 1.0
      %v909 = vrcp.pop %v908
      %v910 = vmul.f32 1.0, %v909
      %v912 = vrot.slane %v762, 1
      %v914 = vadd.f32 %v912, %v832
      %v915 = vxor.u32 %v914, 2147483648
      %v916 = vmul.f32 %v915, 1.442695
      %v917 = vpow.pop %v916
      %v918 = vadd.f32 %v917, 1.0
      %v919 = vrcp.pop %v918
      %v920 = vmul.f32 1.0, %v919
      %v921 = vadd.f32 %v901, %v250
      %v922 = vmul.f32 %v910, %v921
      %v923 = vrot.slane %v762, 2
      %v925 = vadd.f32 %v923, %v922
      %v926 = vtanh.pop %v925
      %v927 = vsub.f32 %v759, %v926
      %v928 = vmul.f32 %v920, %v927
      %v929 = vadd.f32 %v926, %v928
      %930 = vst [vmem:[%s195 + $0x3] sm:$0x1] %v929
      %s931 = scalar_lea.vmem %s191, 4
      %v932 = vld [vmem:[%s931] ss:$8 sm:$0x7]
      %933 = vmatprep.subr.mxu0 %v203
      %934 = vmatpush1.msra.mxu0 %v202
      %935 = vmatprep.subr.mxu0 %v206
      %936 = vmatpush1.msra.mxu0 %v205
      %937 = vmatprep.subr.mxu0 %v209
      %938 = vmatpush1.msra.mxu0 %v208
      %939 = vmatprep.subr.mxu0 %v212
      %940 = vmatpush1.msra.mxu0 %v211
      %941 = vmatprep.subr.mxu0 %v215
      %942 = vmatpush1.msra.mxu0 %v214
      %943 = vmatprep.subr.mxu0 %v218
      %944 = vmatpush1.msra.mxu0 %v217
      %945 = vmatprep.subr.mxu0 %v221
      %946 = vmatpush1.msra.mxu0 %v220
      %947 = vmatprep.subr.mxu0 %v224
      %948 = vmatpush1.msra.mxu0 %v223
      %949 = vmatprep.subr.mxu0 %v227
      %950 = vmatpush1.msra.mxu0 %v226
      %951 = vmatprep.subr.mxu0 %v230
      %952 = vmatpush1.msra.mxu0 %v229
      %953 = vmatprep.subr.mxu0 %v233
      %954 = vmatpush1.msra.mxu0 %v232
      %955 = vmatprep.subr.mxu0 %v236
      %956 = vmatpush1.msra.mxu0 %v235
      %957 = vmatprep.subr.mxu0 %v239
      %958 = vmatpush1.msra.mxu0 %v238
      %959 = vmatprep.subr.mxu0 %v242
      %960 = vmatpush1.msra.mxu0 %v241
      %961 = vmatprep.subr.mxu0 %v245
      %962 = vmatpush1.msra.mxu0 %v244
      %963 = vmatprep.subr.mxu0 %v248
      %964 = vmatpush1.msra.mxu0 %v247
      %965 = vmatprep.subr.mxu0 0.0
      %966 = vmatpush1.msra.mxu0 0.0
      %967 = vmatprep.subr.mxu0 0.0
      %968 = vmatpush1.msra.mxu0 0.0
      %969 = vmatprep.subr.mxu0 0.0
      %970 = vmatpush1.msra.mxu0 0.0
      %971 = vmatprep.subr.mxu0 0.0
      %972 = vmatpush1.msra.mxu0 0.0
      %973 = vmatprep.subr.mxu0 0.0
      %974 = vmatpush1.msra.mxu0 0.0
      %975 = vmatprep.subr.mxu0 0.0
      %976 = vmatpush1.msra.mxu0 0.0
      %977 = vmatprep.subr.mxu0 0.0
      %978 = vmatpush1.msra.mxu0 0.0
      %979 = vmatprep.subr.mxu0 0.0
      %980 = vmatpush1.msra.mxu0 0.0
      %981 = vmatprep.subr.mxu0 0.0
      %982 = vmatpush1.msra.mxu0 0.0
      %983 = vmatprep.subr.mxu0 0.0
      %984 = vmatpush1.msra.mxu0 0.0
      %985 = vmatprep.subr.mxu0 0.0
      %986 = vmatpush1.msra.mxu0 0.0
      %987 = vmatprep.subr.mxu0 0.0
      %988 = vmatpush1.msra.mxu0 0.0
      %989 = vmatprep.subr.mxu0 0.0
      %990 = vmatpush1.msra.mxu0 0.0
      %991 = vmatprep.subr.mxu0 0.0
      %992 = vmatpush1.msra.mxu0 0.0
      %993 = vmatprep.subr.mxu0 0.0
      %994 = vmatpush1.msra.mxu0 0.0
      %995 = vmatprep.subr.mxu0 0.0
      %996 = vmatpush1.msra.mxu0 0.0
      %997 = vmatprep.mubr.f32.mxu0 0.0
      %998 = vmatmul.mubr.f32.gmra.mrb[0].mxu0 %v929
      %v999 = vpop.f32.mrb[0].mxu0
      %v1000 = vadd.f32 0.0, %v999
      %v1001 = vpop.f32.mrb[0].mxu0
      %v1002 = vadd.f32 0.0, %v1001
      %1003 = vdwg.mxu0
      %1004 = vmatprep.subr.mxu0 0.0
      %1005 = vmatpush1.msra.mxu0 %v204
      %1006 = vmatprep.subr.mxu0 0.0
      %1007 = vmatpush1.msra.mxu0 %v207
      %1008 = vmatprep.subr.mxu0 0.0
      %1009 = vmatpush1.msra.mxu0 %v210
      %1010 = vmatprep.subr.mxu0 0.0
      %1011 = vmatpush1.msra.mxu0 %v213
      %1012 = vmatprep.subr.mxu0 0.0
      %1013 = vmatpush1.msra.mxu0 %v216
      %1014 = vmatprep.subr.mxu0 0.0
      %1015 = vmatpush1.msra.mxu0 %v219
      %1016 = vmatprep.subr.mxu0 0.0
      %1017 = vmatpush1.msra.mxu0 %v222
      %1018 = vmatprep.subr.mxu0 0.0
      %1019 = vmatpush1.msra.mxu0 %v225
      %1020 = vmatprep.subr.mxu0 0.0
      %1021 = vmatpush1.msra.mxu0 %v228
      %1022 = vmatprep.subr.mxu0 0.0
      %1023 = vmatpush1.msra.mxu0 %v231
      %1024 = vmatprep.subr.mxu0 0.0
      %1025 = vmatpush1.msra.mxu0 %v234
      %1026 = vmatprep.subr.mxu0 0.0
      %1027 = vmatpush1.msra.mxu0 %v237
      %1028 = vmatprep.subr.mxu0 0.0
      %1029 = vmatpush1.msra.mxu0 %v240
      %1030 = vmatprep.subr.mxu0 0.0
      %1031 = vmatpush1.msra.mxu0 %v243
      %1032 = vmatprep.subr.mxu0 0.0
      %1033 = vmatpush1.msra.mxu0 %v246
      %1034 = vmatprep.subr.mxu0 0.0
      %1035 = vmatpush1.msra.mxu0 %v249
      %1036 = vmatprep.subr.mxu0 0.0
      %1037 = vmatpush1.msra.mxu0 0.0
      %1038 = vmatprep.subr.mxu0 0.0
      %1039 = vmatpush1.msra.mxu0 0.0
      %1040 = vmatprep.subr.mxu0 0.0
      %1041 = vmatpush1.msra.mxu0 0.0
      %1042 = vmatprep.subr.mxu0 0.0
      %1043 = vmatpush1.msra.mxu0 0.0
      %1044 = vmatprep.subr.mxu0 0.0
      %1045 = vmatpush1.msra.mxu0 0.0
      %1046 = vmatprep.subr.mxu0 0.0
      %1047 = vmatpush1.msra.mxu0 0.0
      %1048 = vmatprep.subr.mxu0 0.0
      %1049 = vmatpush1.msra.mxu0 0.0
      %1050 = vmatprep.subr.mxu0 0.0
      %1051 = vmatpush1.msra.mxu0 0.0
      %1052 = vmatprep.subr.mxu0 0.0
      %1053 = vmatpush1.msra.mxu0 0.0
      %1054 = vmatprep.subr.mxu0 0.0
      %1055 = vmatpush1.msra.mxu0 0.0
      %1056 = vmatprep.subr.mxu0 0.0
      %1057 = vmatpush1.msra.mxu0 0.0
      %1058 = vmatprep.subr.mxu0 0.0
      %1059 = vmatpush1.msra.mxu0 0.0
      %1060 = vmatprep.subr.mxu0 0.0
      %1061 = vmatpush1.msra.mxu0 0.0
      %1062 = vmatprep.subr.mxu0 0.0
      %1063 = vmatpush1.msra.mxu0 0.0
      %1064 = vmatprep.subr.mxu0 0.0
      %1065 = vmatpush1.msra.mxu0 0.0
      %1066 = vmatprep.subr.mxu0 0.0
      %1067 = vmatpush1.msra.mxu0 0.0
      %1068 = vmatprep.mubr.f32.mxu0 0.0
      %1069 = vmatmul.mubr.f32.gmra.mrb[0].mxu0 %v929
      %v1070 = vpop.f32.mrb[0].mxu0
      %v1071 = vadd.f32 0.0, %v1070
      %v1072 = vpop.f32.mrb[0].mxu0
      %1073 = vdwg.mxu0
      %v1074 = vadd.f32 %v932, %v1000
      %v1075 = vxor.u32 %v1074, 2147483648
      %v1076 = vmul.f32 %v1075, 1.442695
      %v1077 = vpow.pop %v1076
      %v1078 = vadd.f32 %v1077, 1.0
      %v1079 = vrcp.pop %v1078
      %v1080 = vmul.f32 1.0, %v1079
      %v1082 = vrot.slane %v932, 1
      %v1084 = vadd.f32 %v1082, %v1002
      %v1085 = vxor.u32 %v1084, 2147483648
      %v1086 = vmul.f32 %v1085, 1.442695
      %v1087 = vpow.pop %v1086
      %v1088 = vadd.f32 %v1087, 1.0
      %v1089 = vrcp.pop %v1088
      %v1090 = vmul.f32 1.0, %v1089
      %v1091 = vadd.f32 %v1071, %v250
      %v1092 = vmul.f32 %v1080, %v1091
      %v1093 = vrot.slane %v932, 2
      %v1095 = vadd.f32 %v1093, %v1092
      %v1096 = vtanh.pop %v1095
      %v1097 = vsub.f32 %v929, %v1096
      %v1098 = vmul.f32 %v1090, %v1097
      %v1099 = vadd.f32 %v1096, %v1098
      %1100 = vst [vmem:[%s195 + $0x4] sm:$0x1] %v1099
      %s1101 = scalar_lea.vmem %s191, 5
      %v1102 = vld [vmem:[%s1101] ss:$8 sm:$0x7]
      %1103 = vmatprep.subr.mxu0 %v203
      %1104 = vmatpush1.msra.mxu0 %v202
      %1105 = vmatprep.subr.mxu0 %v206
      %1106 = vmatpush1.msra.mxu0 %v205
      %1107 = vmatprep.subr.mxu0 %v209
      %1108 = vmatpush1.msra.mxu0 %v208
      %1109 = vmatprep.subr.mxu0 %v212
      %1110 = vmatpush1.msra.mxu0 %v211
      %1111 = vmatprep.subr.mxu0 %v215
      %1112 = vmatpush1.msra.mxu0 %v214
      %1113 = vmatprep.subr.mxu0 %v218
      %1114 = vmatpush1.msra.mxu0 %v217
      %1115 = vmatprep.subr.mxu0 %v221
      %1116 = vmatpush1.msra.mxu0 %v220
      %1117 = vmatprep.subr.mxu0 %v224
      %1118 = vmatpush1.msra.mxu0 %v223
      %1119 = vmatprep.subr.mxu0 %v227
      %1120 = vmatpush1.msra.mxu0 %v226
      %1121 = vmatprep.subr.mxu0 %v230
      %1122 = vmatpush1.msra.mxu0 %v229
      %1123 = vmatprep.subr.mxu0 %v233
      %1124 = vmatpush1.msra.mxu0 %v232
      %1125 = vmatprep.subr.mxu0 %v236
      %1126 = vmatpush1.msra.mxu0 %v235
      %1127 = vmatprep.subr.mxu0 %v239
      %1128 = vmatpush1.msra.mxu0 %v238
      %1129 = vmatprep.subr.mxu0 %v242
      %1130 = vmatpush1.msra.mxu0 %v241
      %1131 = vmatprep.subr.mxu0 %v245
      %1132 = vmatpush1.msra.mxu0 %v244
      %1133 = vmatprep.subr.mxu0 %v248
      %1134 = vmatpush1.msra.mxu0 %v247
      %1135 = vmatprep.subr.mxu0 0.0
      %1136 = vmatpush1.msra.mxu0 0.0
      %1137 = vmatprep.subr.mxu0 0.0
      %1138 = vmatpush1.msra.mxu0 0.0
      %1139 = vmatprep.subr.mxu0 0.0
      %1140 = vmatpush1.msra.mxu0 0.0
      %1141 = vmatprep.subr.mxu0 0.0
      %1142 = vmatpush1.msra.mxu0 0.0
      %1143 = vmatprep.subr.mxu0 0.0
      %1144 = vmatpush1.msra.mxu0 0.0
      %1145 = vmatprep.subr.mxu0 0.0
      %1146 = vmatpush1.msra.mxu0 0.0
      %1147 = vmatprep.subr.mxu0 0.0
      %1148 = vmatpush1.msra.mxu0 0.0
      %1149 = vmatprep.subr.mxu0 0.0
      %1150 = vmatpush1.msra.mxu0 0.0
      %1151 = vmatprep.subr.mxu0 0.0
      %1152 = vmatpush1.msra.mxu0 0.0
      %1153 = vmatprep.subr.mxu0 0.0
      %1154 = vmatpush1.msra.mxu0 0.0
      %1155 = vmatprep.subr.mxu0 0.0
      %1156 = vmatpush1.msra.mxu0 0.0
      %1157 = vmatprep.subr.mxu0 0.0
      %1158 = vmatpush1.msra.mxu0 0.0
      %1159 = vmatprep.subr.mxu0 0.0
      %1160 = vmatpush1.msra.mxu0 0.0
      %1161 = vmatprep.subr.mxu0 0.0
      %1162 = vmatpush1.msra.mxu0 0.0
      %1163 = vmatprep.subr.mxu0 0.0
      %1164 = vmatpush1.msra.mxu0 0.0
      %1165 = vmatprep.subr.mxu0 0.0
      %1166 = vmatpush1.msra.mxu0 0.0
      %1167 = vmatprep.mubr.f32.mxu0 0.0
      %1168 = vmatmul.mubr.f32.gmra.mrb[0].mxu0 %v1099
      %v1169 = vpop.f32.mrb[0].mxu0
      %v1170 = vadd.f32 0.0, %v1169
      %v1171 = vpop.f32.mrb[0].mxu0
      %v1172 = vadd.f32 0.0, %v1171
      %1173 = vdwg.mxu0
      %1174 = vmatprep.subr.mxu0 0.0
      %1175 = vmatpush1.msra.mxu0 %v204
      %1176 = vmatprep.subr.mxu0 0.0
      %1177 = vmatpush1.msra.mxu0 %v207
      %1178 = vmatprep.subr.mxu0 0.0
      %1179 = vmatpush1.msra.mxu0 %v210
      %1180 = vmatprep.subr.mxu0 0.0
      %1181 = vmatpush1.msra.mxu0 %v213
      %1182 = vmatprep.subr.mxu0 0.0
      %1183 = vmatpush1.msra.mxu0 %v216
      %1184 = vmatprep.subr.mxu0 0.0
      %1185 = vmatpush1.msra.mxu0 %v219
      %1186 = vmatprep.subr.mxu0 0.0
      %1187 = vmatpush1.msra.mxu0 %v222
      %1188 = vmatprep.subr.mxu0 0.0
      %1189 = vmatpush1.msra.mxu0 %v225
      %1190 = vmatprep.subr.mxu0 0.0
      %1191 = vmatpush1.msra.mxu0 %v228
      %1192 = vmatprep.subr.mxu0 0.0
      %1193 = vmatpush1.msra.mxu0 %v231
      %1194 = vmatprep.subr.mxu0 0.0
      %1195 = vmatpush1.msra.mxu0 %v234
      %1196 = vmatprep.subr.mxu0 0.0
      %1197 = vmatpush1.msra.mxu0 %v237
      %1198 = vmatprep.subr.mxu0 0.0
      %1199 = vmatpush1.msra.mxu0 %v240
      %1200 = vmatprep.subr.mxu0 0.0
      %1201 = vmatpush1.msra.mxu0 %v243
      %1202 = vmatprep.subr.mxu0 0.0
      %1203 = vmatpush1.msra.mxu0 %v246
      %1204 = vmatprep.subr.mxu0 0.0
      %1205 = vmatpush1.msra.mxu0 %v249
      %1206 = vmatprep.subr.mxu0 0.0
      %1207 = vmatpush1.msra.mxu0 0.0
      %1208 = vmatprep.subr.mxu0 0.0
      %1209 = vmatpush1.msra.mxu0 0.0
      %1210 = vmatprep.subr.mxu0 0.0
      %1211 = vmatpush1.msra.mxu0 0.0
      %1212 = vmatprep.subr.mxu0 0.0
      %1213 = vmatpush1.msra.mxu0 0.0
      %1214 = vmatprep.subr.mxu0 0.0
      %1215 = vmatpush1.msra.mxu0 0.0
      %1216 = vmatprep.subr.mxu0 0.0
      %1217 = vmatpush1.msra.mxu0 0.0
      %1218 = vmatprep.subr.mxu0 0.0
      %1219 = vmatpush1.msra.mxu0 0.0
      %1220 = vmatprep.subr.mxu0 0.0
      %1221 = vmatpush1.msra.mxu0 0.0
      %1222 = vmatprep.subr.mxu0 0.0
      %1223 = vmatpush1.msra.mxu0 0.0
      %1224 = vmatprep.subr.mxu0 0.0
      %1225 = vmatpush1.msra.mxu0 0.0
      %1226 = vmatprep.subr.mxu0 0.0
      %1227 = vmatpush1.msra.mxu0 0.0
      %1228 = vmatprep.subr.mxu0 0.0
      %1229 = vmatpush1.msra.mxu0 0.0
      %1230 = vmatprep.subr.mxu0 0.0
      %1231 = vmatpush1.msra.mxu0 0.0
      %1232 = vmatprep.subr.mxu0 0.0
      %1233 = vmatpush1.msra.mxu0 0.0
      %1234 = vmatprep.subr.mxu0 0.0
      %1235 = vmatpush1.msra.mxu0 0.0
      %1236 = vmatprep.subr.mxu0 0.0
      %1237 = vmatpush1.msra.mxu0 0.0
      %1238 = vmatprep.mubr.f32.mxu0 0.0
      %1239 = vmatmul.mubr.f32.gmra.mrb[0].mxu0 %v1099
      %v1240 = vpop.f32.mrb[0].mxu0
      %v1241 = vadd.f32 0.0, %v1240
      %v1242 = vpop.f32.mrb[0].mxu0
      %1243 = vdwg.mxu0
      %v1244 = vadd.f32 %v1102, %v1170
      %v1245 = vxor.u32 %v1244, 2147483648
      %v1246 = vmul.f32 %v1245, 1.442695
      %v1247 = vpow.pop %v1246
      %v1248 = vadd.f32 %v1247, 1.0
      %v1249 = vrcp.pop %v1248
      %v1250 = vmul.f32 1.0, %v1249
      %v1252 = vrot.slane %v1102, 1
      %v1254 = vadd.f32 %v1252, %v1172
      %v1255 = vxor.u32 %v1254, 2147483648
      %v1256 = vmul.f32 %v1255, 1.442695
      %v1257 = vpow.pop %v1256
      %v1258 = vadd.f32 %v1257, 1.0
      %v1259 = vrcp.pop %v1258
      %v1260 = vmul.f32 1.0, %v1259
      %v1261 = vadd.f32 %v1241, %v250
      %v1262 = vmul.f32 %v1250, %v1261
      %v1263 = vrot.slane %v1102, 2
      %v1265 = vadd.f32 %v1263, %v1262
      %v1266 = vtanh.pop %v1265
      %v1267 = vsub.f32 %v1099, %v1266
      %v1268 = vmul.f32 %v1260, %v1267
      %v1269 = vadd.f32 %v1266, %v1268
      %1270 = vst [vmem:[%s195 + $0x5] sm:$0x1] %v1269
      %s1271 = scalar_lea.vmem %s191, 6
      %v1272 = vld [vmem:[%s1271] ss:$8 sm:$0x7]
      %1273 = vmatprep.subr.mxu0 %v203
      %1274 = vmatpush1.msra.mxu0 %v202
      %1275 = vmatprep.subr.mxu0 %v206
      %1276 = vmatpush1.msra.mxu0 %v205
      %1277 = vmatprep.subr.mxu0 %v209
      %1278 = vmatpush1.msra.mxu0 %v208
      %1279 = vmatprep.subr.mxu0 %v212
      %1280 = vmatpush1.msra.mxu0 %v211
      %1281 = vmatprep.subr.mxu0 %v215
      %1282 = vmatpush1.msra.mxu0 %v214
      %1283 = vmatprep.subr.mxu0 %v218
      %1284 = vmatpush1.msra.mxu0 %v217
      %1285 = vmatprep.subr.mxu0 %v221
      %1286 = vmatpush1.msra.mxu0 %v220
      %1287 = vmatprep.subr.mxu0 %v224
      %1288 = vmatpush1.msra.mxu0 %v223
      %1289 = vmatprep.subr.mxu0 %v227
      %1290 = vmatpush1.msra.mxu0 %v226
      %1291 = vmatprep.subr.mxu0 %v230
      %1292 = vmatpush1.msra.mxu0 %v229
      %1293 = vmatprep.subr.mxu0 %v233
      %1294 = vmatpush1.msra.mxu0 %v232
      %1295 = vmatprep.subr.mxu0 %v236
      %1296 = vmatpush1.msra.mxu0 %v235
      %1297 = vmatprep.subr.mxu0 %v239
      %1298 = vmatpush1.msra.mxu0 %v238
      %1299 = vmatprep.subr.mxu0 %v242
      %1300 = vmatpush1.msra.mxu0 %v241
      %1301 = vmatprep.subr.mxu0 %v245
      %1302 = vmatpush1.msra.mxu0 %v244
      %1303 = vmatprep.subr.mxu0 %v248
      %1304 = vmatpush1.msra.mxu0 %v247
      %1305 = vmatprep.subr.mxu0 0.0
      %1306 = vmatpush1.msra.mxu0 0.0
      %1307 = vmatprep.subr.mxu0 0.0
      %1308 = vmatpush1.msra.mxu0 0.0
      %1309 = vmatprep.subr.mxu0 0.0
      %1310 = vmatpush1.msra.mxu0 0.0
      %1311 = vmatprep.subr.mxu0 0.0
      %1312 = vmatpush1.msra.mxu0 0.0
      %1313 = vmatprep.subr.mxu0 0.0
      %1314 = vmatpush1.msra.mxu0 0.0
      %1315 = vmatprep.subr.mxu0 0.0
      %1316 = vmatpush1.msra.mxu0 0.0
      %1317 = vmatprep.subr.mxu0 0.0
      %1318 = vmatpush1.msra.mxu0 0.0
      %1319 = vmatprep.subr.mxu0 0.0
      %1320 = vmatpush1.msra.mxu0 0.0
      %1321 = vmatprep.subr.mxu0 0.0
      %1322 = vmatpush1.msra.mxu0 0.0
      %1323 = vmatprep.subr.mxu0 0.0
      %1324 = vmatpush1.msra.mxu0 0.0
      %1325 = vmatprep.subr.mxu0 0.0
      %1326 = vmatpush1.msra.mxu0 0.0
      %1327 = vmatprep.subr.mxu0 0.0
      %1328 = vmatpush1.msra.mxu0 0.0
      %1329 = vmatprep.subr.mxu0 0.0
      %1330 = vmatpush1.msra.mxu0 0.0
      %1331 = vmatprep.subr.mxu0 0.0
      %1332 = vmatpush1.msra.mxu0 0.0
      %1333 = vmatprep.subr.mxu0 0.0
      %1334 = vmatpush1.msra.mxu0 0.0
      %1335 = vmatprep.subr.mxu0 0.0
      %1336 = vmatpush1.msra.mxu0 0.0
      %1337 = vmatprep.mubr.f32.mxu0 0.0
      %1338 = vmatmul.mubr.f32.gmra.mrb[0].mxu0 %v1269
      %v1339 = vpop.f32.mrb[0].mxu0
      %v1340 = vadd.f32 0.0, %v1339
      %v1341 = vpop.f32.mrb[0].mxu0
      %v1342 = vadd.f32 0.0, %v1341
      %1343 = vdwg.mxu0
      %1344 = vmatprep.subr.mxu0 0.0
      %1345 = vmatpush1.msra.mxu0 %v204
      %1346 = vmatprep.subr.mxu0 0.0
      %1347 = vmatpush1.msra.mxu0 %v207
      %1348 = vmatprep.subr.mxu0 0.0
      %1349 = vmatpush1.msra.mxu0 %v210
      %1350 = vmatprep.subr.mxu0 0.0
      %1351 = vmatpush1.msra.mxu0 %v213
      %1352 = vmatprep.subr.mxu0 0.0
      %1353 = vmatpush1.msra.mxu0 %v216
      %1354 = vmatprep.subr.mxu0 0.0
      %1355 = vmatpush1.msra.mxu0 %v219
      %1356 = vmatprep.subr.mxu0 0.0
      %1357 = vmatpush1.msra.mxu0 %v222
      %1358 = vmatprep.subr.mxu0 0.0
      %1359 = vmatpush1.msra.mxu0 %v225
      %1360 = vmatprep.subr.mxu0 0.0
      %1361 = vmatpush1.msra.mxu0 %v228
      %1362 = vmatprep.subr.mxu0 0.0
      %1363 = vmatpush1.msra.mxu0 %v231
      %1364 = vmatprep.subr.mxu0 0.0
      %1365 = vmatpush1.msra.mxu0 %v234
      %1366 = vmatprep.subr.mxu0 0.0
      %1367 = vmatpush1.msra.mxu0 %v237
      %1368 = vmatprep.subr.mxu0 0.0
      %1369 = vmatpush1.msra.mxu0 %v240
      %1370 = vmatprep.subr.mxu0 0.0
      %1371 = vmatpush1.msra.mxu0 %v243
      %1372 = vmatprep.subr.mxu0 0.0
      %1373 = vmatpush1.msra.mxu0 %v246
      %1374 = vmatprep.subr.mxu0 0.0
      %1375 = vmatpush1.msra.mxu0 %v249
      %1376 = vmatprep.subr.mxu0 0.0
      %1377 = vmatpush1.msra.mxu0 0.0
      %1378 = vmatprep.subr.mxu0 0.0
      %1379 = vmatpush1.msra.mxu0 0.0
      %1380 = vmatprep.subr.mxu0 0.0
      %1381 = vmatpush1.msra.mxu0 0.0
      %1382 = vmatprep.subr.mxu0 0.0
      %1383 = vmatpush1.msra.mxu0 0.0
      %1384 = vmatprep.subr.mxu0 0.0
      %1385 = vmatpush1.msra.mxu0 0.0
      %1386 = vmatprep.subr.mxu0 0.0
      %1387 = vmatpush1.msra.mxu0 0.0
      %1388 = vmatprep.subr.mxu0 0.0
      %1389 = vmatpush1.msra.mxu0 0.0
      %1390 = vmatprep.subr.mxu0 0.0
      %1391 = vmatpush1.msra.mxu0 0.0
      %1392 = vmatprep.subr.mxu0 0.0
      %1393 = vmatpush1.msra.mxu0 0.0
      %1394 = vmatprep.subr.mxu0 0.0
      %1395 = vmatpush1.msra.mxu0 0.0
      %1396 = vmatprep.subr.mxu0 0.0
      %1397 = vmatpush1.msra.mxu0 0.0
      %1398 = vmatprep.subr.mxu0 0.0
      %1399 = vmatpush1.msra.mxu0 0.0
      %1400 = vmatprep.subr.mxu0 0.0
      %1401 = vmatpush1.msra.mxu0 0.0
      %1402 = vmatprep.subr.mxu0 0.0
      %1403 = vmatpush1.msra.mxu0 0.0
      %1404 = vmatprep.subr.mxu0 0.0
      %1405 = vmatpush1.msra.mxu0 0.0
      %1406 = vmatprep.subr.mxu0 0.0
      %1407 = vmatpush1.msra.mxu0 0.0
      %1408 = vmatprep.mubr.f32.mxu0 0.0
      %1409 = vmatmul.mubr.f32.gmra.mrb[0].mxu0 %v1269
      %v1410 = vpop.f32.mrb[0].mxu0
      %v1411 = vadd.f32 0.0, %v1410
      %v1412 = vpop.f32.mrb[0].mxu0
      %1413 = vdwg.mxu0
      %v1414 = vadd.f32 %v1272, %v1340
      %v1415 = vxor.u32 %v1414, 2147483648
      %v1416 = vmul.f32 %v1415, 1.442695
      %v1417 = vpow.pop %v1416
      %v1418 = vadd.f32 %v1417, 1.0
      %v1419 = vrcp.pop %v1418
      %v1420 = vmul.f32 1.0, %v1419
      %v1422 = vrot.slane %v1272, 1
      %v1424 = vadd.f32 %v1422, %v1342
      %v1425 = vxor.u32 %v1424, 2147483648
      %v1426 = vmul.f32 %v1425, 1.442695
      %v1427 = vpow.pop %v1426
      %v1428 = vadd.f32 %v1427, 1.0
      %v1429 = vrcp.pop %v1428
      %v1430 = vmul.f32 1.0, %v1429
      %v1431 = vadd.f32 %v1411, %v250
      %v1432 = vmul.f32 %v1420, %v1431
      %v1433 = vrot.slane %v1272, 2
      %v1435 = vadd.f32 %v1433, %v1432
      %v1436 = vtanh.pop %v1435
      %v1437 = vsub.f32 %v1269, %v1436
      %v1438 = vmul.f32 %v1430, %v1437
      %v1439 = vadd.f32 %v1436, %v1438
      %1440 = vst [vmem:[%s195 + $0x6] sm:$0x1] %v1439
      %s1441 = scalar_lea.vmem %s191, 7
      %v1442 = vld [vmem:[%s1441] ss:$8 sm:$0x7]
      %1443 = vmatprep.subr.mxu0 %v203
      %1444 = vmatpush1.msra.mxu0 %v202
      %1445 = vmatprep.subr.mxu0 %v206
      %1446 = vmatpush1.msra.mxu0 %v205
      %1447 = vmatprep.subr.mxu0 %v209
      %1448 = vmatpush1.msra.mxu0 %v208
      %1449 = vmatprep.subr.mxu0 %v212
      %1450 = vmatpush1.msra.mxu0 %v211
      %1451 = vmatprep.subr.mxu0 %v215
      %1452 = vmatpush1.msra.mxu0 %v214
      %1453 = vmatprep.subr.mxu0 %v218
      %1454 = vmatpush1.msra.mxu0 %v217
      %1455 = vmatprep.subr.mxu0 %v221
      %1456 = vmatpush1.msra.mxu0 %v220
      %1457 = vmatprep.subr.mxu0 %v224
      %1458 = vmatpush1.msra.mxu0 %v223
      %1459 = vmatprep.subr.mxu0 %v227
      %1460 = vmatpush1.msra.mxu0 %v226
      %1461 = vmatprep.subr.mxu0 %v230
      %1462 = vmatpush1.msra.mxu0 %v229
      %1463 = vmatprep.subr.mxu0 %v233
      %1464 = vmatpush1.msra.mxu0 %v232
      %1465 = vmatprep.subr.mxu0 %v236
      %1466 = vmatpush1.msra.mxu0 %v235
      %1467 = vmatprep.subr.mxu0 %v239
      %1468 = vmatpush1.msra.mxu0 %v238
      %1469 = vmatprep.subr.mxu0 %v242
      %1470 = vmatpush1.msra.mxu0 %v241
      %1471 = vmatprep.subr.mxu0 %v245
      %1472 = vmatpush1.msra.mxu0 %v244
      %1473 = vmatprep.subr.mxu0 %v248
      %1474 = vmatpush1.msra.mxu0 %v247
      %1475 = vmatprep.subr.mxu0 0.0
      %1476 = vmatpush1.msra.mxu0 0.0
      %1477 = vmatprep.subr.mxu0 0.0
      %1478 = vmatpush1.msra.mxu0 0.0
      %1479 = vmatprep.subr.mxu0 0.0
      %1480 = vmatpush1.msra.mxu0 0.0
      %1481 = vmatprep.subr.mxu0 0.0
      %1482 = vmatpush1.msra.mxu0 0.0
      %1483 = vmatprep.subr.mxu0 0.0
      %1484 = vmatpush1.msra.mxu0 0.0
      %1485 = vmatprep.subr.mxu0 0.0
      %1486 = vmatpush1.msra.mxu0 0.0
      %1487 = vmatprep.subr.mxu0 0.0
      %1488 = vmatpush1.msra.mxu0 0.0
      %1489 = vmatprep.subr.mxu0 0.0
      %1490 = vmatpush1.msra.mxu0 0.0
      %1491 = vmatprep.subr.mxu0 0.0
      %1492 = vmatpush1.msra.mxu0 0.0
      %1493 = vmatprep.subr.mxu0 0.0
      %1494 = vmatpush1.msra.mxu0 0.0
      %1495 = vmatprep.subr.mxu0 0.0
      %1496 = vmatpush1.msra.mxu0 0.0
      %1497 = vmatprep.subr.mxu0 0.0
      %1498 = vmatpush1.msra.mxu0 0.0
      %1499 = vmatprep.subr.mxu0 0.0
      %1500 = vmatpush1.msra.mxu0 0.0
      %1501 = vmatprep.subr.mxu0 0.0
      %1502 = vmatpush1.msra.mxu0 0.0
      %1503 = vmatprep.subr.mxu0 0.0
      %1504 = vmatpush1.msra.mxu0 0.0
      %1505 = vmatprep.subr.mxu0 0.0
      %1506 = vmatpush1.msra.mxu0 0.0
      %1507 = vmatprep.mubr.f32.mxu0 0.0
      %1508 = vmatmul.mubr.f32.gmra.mrb[0].mxu0 %v1439
      %v1509 = vpop.f32.mrb[0].mxu0
      %v1510 = vadd.f32 0.0, %v1509
      %v1511 = vpop.f32.mrb[0].mxu0
      %v1512 = vadd.f32 0.0, %v1511
      %1513 = vdwg.mxu0
      %1514 = vmatprep.subr.mxu0 0.0
      %1515 = vmatpush1.msra.mxu0 %v204
      %1516 = vmatprep.subr.mxu0 0.0
      %1517 = vmatpush1.msra.mxu0 %v207
      %1518 = vmatprep.subr.mxu0 0.0
      %1519 = vmatpush1.msra.mxu0 %v210
      %1520 = vmatprep.subr.mxu0 0.0
      %1521 = vmatpush1.msra.mxu0 %v213
      %1522 = vmatprep.subr.mxu0 0.0
      %1523 = vmatpush1.msra.mxu0 %v216
      %1524 = vmatprep.subr.mxu0 0.0
      %1525 = vmatpush1.msra.mxu0 %v219
      %1526 = vmatprep.subr.mxu0 0.0
      %1527 = vmatpush1.msra.mxu0 %v222
      %1528 = vmatprep.subr.mxu0 0.0
      %1529 = vmatpush1.msra.mxu0 %v225
      %1530 = vmatprep.subr.mxu0 0.0
      %1531 = vmatpush1.msra.mxu0 %v228
      %1532 = vmatprep.subr.mxu0 0.0
      %1533 = vmatpush1.msra.mxu0 %v231
      %1534 = vmatprep.subr.mxu0 0.0
      %1535 = vmatpush1.msra.mxu0 %v234
      %1536 = vmatprep.subr.mxu0 0.0
      %1537 = vmatpush1.msra.mxu0 %v237
      %1538 = vmatprep.subr.mxu0 0.0
      %1539 = vmatpush1.msra.mxu0 %v240
      %1540 = vmatprep.subr.mxu0 0.0
      %1541 = vmatpush1.msra.mxu0 %v243
      %1542 = vmatprep.subr.mxu0 0.0
      %1543 = vmatpush1.msra.mxu0 %v246
      %1544 = vmatprep.subr.mxu0 0.0
      %1545 = vmatpush1.msra.mxu0 %v249
      %1546 = vmatprep.subr.mxu0 0.0
      %1547 = vmatpush1.msra.mxu0 0.0
      %1548 = vmatprep.subr.mxu0 0.0
      %1549 = vmatpush1.msra.mxu0 0.0
      %1550 = vmatprep.subr.mxu0 0.0
      %1551 = vmatpush1.msra.mxu0 0.0
      %1552 = vmatprep.subr.mxu0 0.0
      %1553 = vmatpush1.msra.mxu0 0.0
      %1554 = vmatprep.subr.mxu0 0.0
      %1555 = vmatpush1.msra.mxu0 0.0
      %1556 = vmatprep.subr.mxu0 0.0
      %1557 = vmatpush1.msra.mxu0 0.0
      %1558 = vmatprep.subr.mxu0 0.0
      %1559 = vmatpush1.msra.mxu0 0.0
      %1560 = vmatprep.subr.mxu0 0.0
      %1561 = vmatpush1.msra.mxu0 0.0
      %1562 = vmatprep.subr.mxu0 0.0
      %1563 = vmatpush1.msra.mxu0 0.0
      %1564 = vmatprep.subr.mxu0 0.0
      %1565 = vmatpush1.msra.mxu0 0.0
      %1566 = vmatprep.subr.mxu0 0.0
      %1567 = vmatpush1.msra.mxu0 0.0
      %1568 = vmatprep.subr.mxu0 0.0
      %1569 = vmatpush1.msra.mxu0 0.0
      %1570 = vmatprep.subr.mxu0 0.0
      %1571 = vmatpush1.msra.mxu0 0.0
      %1572 = vmatprep.subr.mxu0 0.0
      %1573 = vmatpush1.msra.mxu0 0.0
      %1574 = vmatprep.subr.mxu0 0.0
      %1575 = vmatpush1.msra.mxu0 0.0
      %1576 = vmatprep.subr.mxu0 0.0
      %1577 = vmatpush1.msra.mxu0 0.0
      %1578 = vmatprep.mubr.f32.mxu0 0.0
      %1579 = vmatmul.mubr.f32.gmra.mrb[0].mxu0 %v1439
      %v1580 = vpop.f32.mrb[0].mxu0
      %v1581 = vadd.f32 0.0, %v1580
      %v1582 = vpop.f32.mrb[0].mxu0
      %1583 = vdwg.mxu0
      %v1584 = vadd.f32 %v1442, %v1510
      %v1585 = vxor.u32 %v1584, 2147483648
      %v1586 = vmul.f32 %v1585, 1.442695
      %v1587 = vpow.pop %v1586
      %v1588 = vadd.f32 %v1587, 1.0
      %v1589 = vrcp.pop %v1588
      %v1590 = vmul.f32 1.0, %v1589
      %v1592 = vrot.slane %v1442, 1
      %v1594 = vadd.f32 %v1592, %v1512
      %v1595 = vxor.u32 %v1594, 2147483648
      %v1596 = vmul.f32 %v1595, 1.442695
      %v1597 = vpow.pop %v1596
      %v1598 = vadd.f32 %v1597, 1.0
      %v1599 = vrcp.pop %v1598
      %v1600 = vmul.f32 1.0, %v1599
      %v1601 = vadd.f32 %v1581, %v250
      %v1602 = vmul.f32 %v1590, %v1601
      %v1603 = vrot.slane %v1442, 2
      %v1605 = vadd.f32 %v1603, %v1602
      %v1606 = vtanh.pop %v1605
      %v1607 = vsub.f32 %v1439, %v1606
      %v1608 = vmul.f32 %v1600, %v1607
      %v1609 = vadd.f32 %v1606, %v1608
      %1610 = vst [vmem:[%s195 + $0x7] sm:$0x1] %v1609
      %1611 = vst [vmem:[#allocation2] sm:$0x1] %v1609
      %p1612 = scmp.lt.s32.totalorder %s15, 1
      %s1613 = scalar_select %p1612, %s15, 1
      %s1614 = smul.addr %s1613, 8
      %s1615 = scalar_lea.vmem %s4, %s1614
      // Predicated region
      $region41: #{encoder_rnn_forward.1} parent=35 // pred_check
        %p1616 = pneg %p122
      $region42: #{encoder_rnn_forward.1} parent=35 // pred_check_branch
        %1618 = sbr.rel (%p1616) target = $region44
      $region43: #{encoder_rnn_forward.1} parent=35 // pred_region
        _
      $region44: #{encoder_rnn_forward.1} parent=35 // pred_fallthru
        _
    $region36: #{encoder_rnn_forward.1} parent=5 // pred_fallthru
      _
    %p1619 = scmp.le.s32.totalorder 2, %s10
    // Predicated region
    $region45: #{encoder_rnn_forward.1} parent=5 // pred_check
      %p1620 = pneg %p1619
    $region46: #{encoder_rnn_forward.1} parent=5 // pred_check_branch
      %1622 = sbr.rel (%p1620) target = $region48
    $region47: #{encoder_rnn_forward.1} parent=5 // pred_region
      %s1623 = ssub.s32 %s10, 2
      // Predicated region
      $region49: #{encoder_rnn_forward.1} parent=47 // pred_check
        %p1624 = pneg %p128
      $region50: #{encoder_rnn_forward.1} parent=47 // pred_check_branch
        %1626 = sbr.rel (%p1624) target = $region52
      $region51: #{encoder_rnn_forward.1} parent=47 // pred_region
        %p1627 = scmp.lt.s32.totalorder %s16, 1
        %s1628 = scalar_select %p1627, %s16, 1
        %s1629 = smul.addr %s1628, 8
        %s1630 = scalar_lea.vmem %s4, %s1629
      $region52: #{encoder_rnn_forward.1} parent=47 // pred_fallthru
        _
    $region48: #{encoder_rnn_forward.1} parent=5 // pred_fallthru
      _
  $region6: #{encoder_rnn_forward.1} parent=0 // loop_footer
    %s14 = sadd.s32 1, %s10
  $region7: #{encoder_rnn_forward.1} parent=0 // loop_footer_branch
    %9 = sbr.rel target = $region3
  $region8: #{encoder_rnn_forward.1} parent=0 // loop_exit
    _

</llo_original>
